<compile_context>
chip_gen: v6e
topology: v6e:2x2x1
jax: 0.10.0
libtpu: 0.0.40
codegen_flags: <defaults>
</compile_context>

<pallas_src>
import functools

import jax
import jax.numpy as jnp
from jax import lax
from jax.experimental import pallas as pl
from jax.experimental.pallas import tpu as pltpu

KSIZE = 7
PAD = 3


# ---------------------------------------------------------------------------
# Helpers
# ---------------------------------------------------------------------------
def _vmem_limit_bytes():
    """~3/4 of physical VMEM, capped at 100 MiB (96 MiB v5e/v6e, 48 MiB v7x)."""
    cap = 64 * 1024 * 1024
    try:
        cap = int(pltpu.get_tpu_info().vmem_capacity_bytes)
    except Exception:
        pass  # conservative fallback if the query is unavailable
    return int(min(cap * 3 // 4, 100 * 1024 * 1024))


def _aligned_divisors(n, align):
    """Divisors of n that are multiples of `align`, plus n itself, descending."""
    ds = {n}
    ds.update(d for d in range(align, n + 1, align) if n % d == 0)
    return sorted(ds, reverse=True)


def _conv_sigmoid(w2, bias, w_idx, avg, mx, H, W):
    """7x7 'same' conv of the 2-channel (avg, mx) map + sigmoid -> (1, HW) f32.

    avg/mx: (1, HW) f32. w2: (2, 49) f32 (row 0 = avg-channel taps, row 1 = mx).
    w_idx: (1, HW) int32 column index of each flattened pixel.
    Zero padding is done in value space (one lane concat): vertical out-of-range
    taps read halo zeros; horizontal wrap-around is killed by a per-kw select.
    """
    HW = H * W
    halo = PAD * W + PAD
    zpad = jnp.zeros((2, halo), jnp.float32)
    maps = jnp.concatenate([avg, mx], axis=0)               # (2, HW) sublane-packed
    padded = jnp.concatenate([zpad, maps, zpad], axis=1)    # (2, HW + 2*halo)

    logits2 = jnp.zeros((2, HW), jnp.float32)
    for kw in range(KSIZE):
        dw = kw - PAD
        part = jnp.zeros((2, HW), jnp.float32)
        for kh in range(KSIZE):
            tap = kh * KSIZE + kw
            off = kh * W + kw
            # (2,1) weight column covers both channels with one VPU mul.
            part = part + w2[:, tap:tap + 1] * padded[:, off:off + HW]
        # Horizontal-boundary mask: one compare + one select per kw (none at kw==PAD).
        if dw < 0:
            part = jnp.where(w_idx >= -dw, part, 0.0)
        elif dw > 0:
            part = jnp.where(w_idx < W - dw, part, 0.0)
        logits2 = logits2 + part

    logits = jnp.sum(logits2, axis=0, keepdims=True) + bias  # (1, HW)
    # sigmoid = 1 / (1 + exp(-x)); exp + approx rcp both run on the EUP slot.
    return pl.reciprocal(1.0 + jnp.exp(-logits), approx=True)


# ---------------------------------------------------------------------------
# Fused single-pass kernel (one read + one write of x)
# ---------------------------------------------------------------------------
def _fused_kernel(w_ref, b_ref, widx_ref, x_ref, o_ref, *, H, W):
    # Channel reductions in f32 (bf16-safe); the f32 copy is dead after this.
    xf = x_ref[0].astype(jnp.float32)                        # (C, HW)
    avg = jnp.mean(xf, axis=0, keepdims=True)
    mx = jnp.max(xf, axis=0, keepdims=True)
    att = _conv_sigmoid(w_ref[...], b_ref[0], widx_ref[...], avg, mx, H, W)
    # Re-read x in its native dtype; only the (1,HW) attention map is cast, so
    # the dominant elementwise multiply runs at input width (bf16 VPU on v6e/v7x).
    # TODO(synk): on v5e (no bf16 VALU) an f32 multiply may be preferable for bf16.
    o_ref[0] = x_ref[0] * att.astype(o_ref.dtype)


def _fused_call(x_flat, w2, b1, w_idx, H, W, vmem_limit):
    B, C, HW = x_flat.shape
    cost = pl.CostEstimate(
        flops=int(B * HW * (3 * C + 4 * KSIZE * KSIZE + 16)),
        transcendentals=int(B * HW),
        bytes_accessed=int(2 * B * C * HW * x_flat.dtype.itemsize + HW * 4 + 512),
    )
    return pl.pallas_call(
        functools.partial(_fused_kernel, H=H, W=W),
        out_shape=jax.ShapeDtypeStruct((B, C, HW), x_flat.dtype),
        grid_spec=pltpu.PrefetchScalarGridSpec(
            num_scalar_prefetch=0,
            grid=(B,),
            in_specs=[
                pl.BlockSpec((2, KSIZE * KSIZE), lambda b: (0, 0)),   # conv weights (VMEM)
                pl.BlockSpec(memory_space=pltpu.MemorySpace.SMEM),    # conv bias
                pl.BlockSpec((1, HW), lambda b: (0, 0)),              # column index (int32)
                pl.BlockSpec((1, C, HW), lambda b: (b, 0, 0)),        # x, lane dense
            ],
            out_specs=pl.BlockSpec((1, C, HW), lambda b: (b, 0, 0)),
        ),
        compiler_params=pltpu.CompilerParams(
            dimension_semantics=("parallel",),
            vmem_limit_bytes=vmem_limit,
        ),
        cost_estimate=cost,
    )(w2, b1, w_idx, x_flat)


# ---------------------------------------------------------------------------
# Tiled two-pass path (large C*HW / v7x VMEM / spatial parallelism at B=1)
# ---------------------------------------------------------------------------
def _att_kernel(w_ref, b_ref, widx_ref, x_ref, att_ref, sum_sc, max_sc, *, H, W, C):
    c = pl.program_id(1)

    @pl.when(c == 0)
    def _():
        sum_sc[...] = jnp.zeros_like(sum_sc)
        max_sc[...] = jnp.full_like(max_sc, -jnp.inf)

    xf = x_ref[0].astype(jnp.float32)                        # (tc, HW)
    sum_sc[...] = sum_sc[...] + jnp.sum(xf, axis=0, keepdims=True)
    max_sc[...] = jnp.maximum(max_sc[...], jnp.max(xf, axis=0, keepdims=True))

    @pl.when(c == pl.num_programs(1) - 1)
    def _():
        avg = sum_sc[...] * (1.0 / C)
        att_ref[0] = _conv_sigmoid(w_ref[...], b_ref[0], widx_ref[...],
                                   avg, max_sc[...], H, W)


def _att_call(x_flat, w2, b1, w_idx, H, W, tc, vmem_limit):
    B, C, HW = x_flat.shape
    return pl.pallas_call(
        functools.partial(_att_kernel, H=H, W=W, C=C),
        out_shape=jax.ShapeDtypeStruct((B, 1, HW), jnp.float32),
        grid_spec=pltpu.PrefetchScalarGridSpec(
            num_scalar_prefetch=0,
            grid=(B, C // tc),
            in_specs=[
                pl.BlockSpec((2, KSIZE * KSIZE), lambda b, c: (0, 0)),
                pl.BlockSpec(memory_space=pltpu.MemorySpace.SMEM),
                pl.BlockSpec((1, HW), lambda b, c: (0, 0)),
                pl.BlockSpec((1, tc, HW), lambda b, c: (b, c, 0)),
            ],
            out_specs=pl.BlockSpec((1, 1, HW), lambda b, c: (b, 0, 0)),
            scratch_shapes=[pltpu.VMEM((1, HW), jnp.float32),   # running sum
                            pltpu.VMEM((1, HW), jnp.float32)],  # running max
        ),
        compiler_params=pltpu.CompilerParams(
            dimension_semantics=("parallel", "arbitrary"),
            vmem_limit_bytes=vmem_limit,
        ),
    )(w2, b1, w_idx, x_flat)


def _mul_kernel(att_ref, x_ref, o_ref):
    # x stays in its native dtype; only the (1, ts) attention tile is cast.
    o_ref[0] = x_ref[0] * att_ref[0].astype(o_ref.dtype)


def _mul_call(x_flat, att, tc, ts, vmem_limit):
    B, C, HW = x_flat.shape
    return pl.pallas_call(
        _mul_kernel,
        out_shape=jax.ShapeDtypeStruct((B, C, HW), x_flat.dtype),
        grid_spec=pltpu.PrefetchScalarGridSpec(
            num_scalar_prefetch=0,
            grid=(B, C // tc, HW // ts),
            in_specs=[
                pl.BlockSpec((1, 1, ts), lambda b, c, s: (b, 0, s)),   # att tile
                pl.BlockSpec((1, tc, ts), lambda b, c, s: (b, c, s)),  # x tile
            ],
            out_specs=pl.BlockSpec((1, tc, ts), lambda b, c, s: (b, c, s)),
        ),
        compiler_params=pltpu.CompilerParams(
            dimension_semantics=("parallel", "parallel", "parallel"),
            vmem_limit_bytes=vmem_limit,
        ),
    )(att, x_flat)


# ---------------------------------------------------------------------------
# Public wrapper
# ---------------------------------------------------------------------------
def spatial_attention(x, conv_w, conv_b, *, force_tiled=False, tile_c=None, tile_hw=None):
    """x: (B, C, H, W); conv_w: (1, 2, 7, 7) f32; conv_b: (1,) f32."""
    B, C, H, W = x.shape
    HW = H * W
    isz = x.dtype.itemsize

    w2 = conv_w.reshape(2, KSIZE * KSIZE).astype(jnp.float32)   # row0=avg ch, row1=max ch
    b1 = conv_b.reshape(1).astype(jnp.float32)
    w_idx = jnp.tile(jnp.arange(W, dtype=jnp.int32), H).reshape(1, HW)
    x_flat = x.reshape(B, C, HW)                                 # free reshape of NCHW

    vmem_limit = _vmem_limit_bytes()

    # Fused single pass (lowest HBM traffic) if a whole (C,HW) slab, double
    # buffered in+out plus f32 temporaries, comfortably fits the VMEM budget.
    fused_bytes = 4 * C * HW * isz + C * HW * 4 + 10 * HW * 4 + (1 << 16)
    if not force_tiled and fused_bytes <= (3 * vmem_limit) // 4:
        out_flat = _fused_call(x_flat, w2, b1, w_idx, H, W, vmem_limit)
        return out_flat.reshape(B, C, H, W)

    # Tiled two-pass path. Tiles must keep the last two block dims either full
    # or multiples of (8, 128) so stores stay unmasked / lane-dense.
    if tile_c is not None:
        assert C % tile_c == 0 and (tile_c == C or tile_c % 8 == 0), "bad tile_c"
    if tile_hw is not None:
        assert HW % tile_hw == 0 and (tile_hw == HW or tile_hw % 128 == 0), "bad tile_hw"

    tc_cands = _aligned_divisors(C, 8)
    ts_cands = _aligned_divisors(HW, 128)
    budget = vmem_limit // 2
    tc_a = tile_c or next((d for d in tc_cands if 2 * d * HW * isz <= budget), tc_cands[-1])
    ts = tile_hw or next((d for d in ts_cands if 4 * C * d * isz <= budget), ts_cands[-1])
    tc_b = tile_c or next((d for d in tc_cands if 4 * d * ts * isz <= budget), tc_cands[-1])

    att = _att_call(x_flat, w2, b1, w_idx, H, W, tc_a, vmem_limit)   # (B, 1, HW) f32
    out_flat = _mul_call(x_flat, att, tc_b, ts, vmem_limit)
    return out_flat.reshape(B, C, H, W)


def spatial_attention_ref(x, conv_w, conv_b):
    """Pure-JAX reference mirroring the PyTorch module exactly."""
    avg = jnp.mean(x, axis=1, keepdims=True)
    mx = jnp.max(x, axis=1, keepdims=True)
    att_in = jnp.concatenate([avg, mx], axis=1)                   # (B, 2, H, W)
    att = lax.conv_general_dilated(
        att_in, conv_w,
        window_strides=(1, 1),
        padding=((PAD, PAD), (PAD, PAD)),
        dimension_numbers=("NCHW", "OIHW", "NCHW"),
    ) + conv_b.reshape(1, 1, 1, 1)
    att = jax.nn.sigmoid(att)                                     # (B, 1, H, W)
    return x * att


if __name__ == "__main__":
    key = jax.random.PRNGKey(0)
    kx, kw, kb, kx2 = jax.random.split(key, 4)

    conv_w = 0.05 * jax.random.normal(kw, (1, 2, KSIZE, KSIZE), dtype=jnp.float32)
    conv_b = 0.1 * jax.random.normal(kb, (1,), dtype=jnp.float32)

    # 1) Small shape -> fused single-pass path (approx sigmoid => relaxed tol).
    x = jax.random.normal(kx, (2, 4, 16, 16), dtype=jnp.float32)
    out = jax.block_until_ready(spatial_attention(x, conv_w, conv_b))
    ref = spatial_attention_ref(x, conv_w, conv_b)
    assert out.shape == ref.shape and out.dtype == ref.dtype
    assert jnp.allclose(out, ref, atol=1e-4, rtol=5e-3), (
        f"fused max abs err = {jnp.max(jnp.abs(out - ref))}")

    # 2) Force the tiled two-pass path (C reduction tiles + spatial multiply tiles).
    x2 = jax.random.normal(kx2, (2, 16, 32, 64), dtype=jnp.float32)
    out2 = jax.block_until_ready(
        spatial_attention(x2, conv_w, conv_b, force_tiled=True, tile_c=8, tile_hw=512))
    ref2 = spatial_attention_ref(x2, conv_w, conv_b)
    assert out2.shape == ref2.shape and out2.dtype == ref2.dtype
    assert jnp.allclose(out2, ref2, atol=1e-4, rtol=5e-3), (
        f"tiled max abs err = {jnp.max(jnp.abs(out2 - ref2))}")

    # 3) bf16 input through the fused path (kernel reduces in f32, multiplies in bf16).
    xb = x.astype(jnp.bfloat16)
    outb = jax.block_until_ready(spatial_attention(xb, conv_w, conv_b))
    refb = spatial_attention_ref(xb.astype(jnp.float32), conv_w, conv_b)
    assert outb.dtype == jnp.bfloat16
    assert jnp.allclose(outb.astype(jnp.float32), refb, atol=5e-2, rtol=5e-2), (
        f"bf16 max abs err = {jnp.max(jnp.abs(outb.astype(jnp.float32) - refb))}")

    print("KERNEL_OK")
</pallas_src>

<mosaic_0001>
module attributes {stable_mosaic.version = 11 : i64} {
  func.func @_fused_kernel(%arg0: i32, %arg1: memref<2x49xf32, #tpu.memory_space<vmem>>, %arg2: memref<1xf32, #tpu.memory_space<smem>>, %arg3: memref<1x256xi32, #tpu.memory_space<vmem>>, %arg4: memref<1x4x256xf32, #tpu.memory_space<vmem>>, %arg5: memref<1x4x256xf32, #tpu.memory_space<vmem>>) attributes {dimension_semantics = [#tpu.dimension_semantics<parallel>], iteration_bounds = array<i64: 2>, scalar_prefetch = 0 : i64, scratch_operands = 0 : i64, tpu.core_type = #tpu.core_type<tc>, window_params = [{pipeline_mode = #tpu.pipeline_mode<synchronous>, transform_indices = @transform_0, window_bounds = array<i64: 2, 49>}, {transform_indices = @transform_1, window_bounds = array<i64: 1>}, {pipeline_mode = #tpu.pipeline_mode<synchronous>, transform_indices = @transform_2, window_bounds = array<i64: 1, 256>}, {transform_indices = @transform_3, window_bounds = array<i64: 1, 4, 256>}, {transform_indices = @transform_4, window_bounds = array<i64: 1, 4, 256>}]} {
    %c0 = arith.constant 0 : index
    %c0_0 = arith.constant 0 : index
    %c0_1 = arith.constant 0 : index
    %0 = vector.load %arg4[%c0, %c0_0, %c0_1] : memref<1x4x256xf32, #tpu.memory_space<vmem>>, vector<1x4x256xf32>
    %1 = vector.shape_cast %0 : vector<1x4x256xf32> to vector<4x256xf32>
    %cst = arith.constant dense<0.000000e+00> : vector<256xf32>
    %2 = vector.multi_reduction <add>, %1, %cst [0] : vector<4x256xf32> to vector<256xf32>
    %3 = vector.shape_cast %2 : vector<256xf32> to vector<1x256xf32>
    %cst_2 = arith.constant 4.000000e+00 : f32
    %4 = vector.broadcast %cst_2 : f32 to vector<1x256xf32>
    %5 = arith.divf %3, %4 : vector<1x256xf32>
    %cst_3 = arith.constant dense<0xFF800000> : vector<256xf32>
    %6 = vector.multi_reduction <maximumf>, %1, %cst_3 [0] : vector<4x256xf32> to vector<256xf32>
    %7 = vector.shape_cast %6 : vector<256xf32> to vector<1x256xf32>
    %c0_4 = arith.constant 0 : index
    %c0_5 = arith.constant 0 : index
    %8 = vector.load %arg1[%c0_4, %c0_5] : memref<2x49xf32, #tpu.memory_space<vmem>>, vector<2x49xf32>
    %c0_6 = arith.constant 0 : index
    %9 = memref.load %arg2[%c0_6] : memref<1xf32, #tpu.memory_space<smem>>
    %c0_7 = arith.constant 0 : index
    %c0_8 = arith.constant 0 : index
    %10 = vector.load %arg3[%c0_7, %c0_8] : memref<1x256xi32, #tpu.memory_space<vmem>>, vector<1x256xi32>
    %cst_9 = arith.constant 0.000000e+00 : f32
    %11 = vector.broadcast %cst_9 : f32 to vector<2x51xf32>
    %12 = tpu.concatenate %5, %7 in 0 : vector<1x256xf32>, vector<1x256xf32> -> vector<2x256xf32>
    %13 = tpu.concatenate %11, %12, %11 in 1 : vector<2x51xf32>, vector<2x256xf32>, vector<2x51xf32> -> vector<2x358xf32>
    %cst_10 = arith.constant 0.000000e+00 : f32
    %14 = vector.broadcast %cst_10 : f32 to vector<2x256xf32>
    %cst_11 = arith.constant 0.000000e+00 : f32
    %15 = vector.broadcast %cst_11 : f32 to vector<2x256xf32>
    %16 = vector.extract_strided_slice %8 {offsets = [0, 0], sizes = [2, 1], strides = [1, 1]} : vector<2x49xf32> to vector<2x1xf32>
    %17 = vector.extract_strided_slice %13 {offsets = [0, 0], sizes = [2, 256], strides = [1, 1]} : vector<2x358xf32> to vector<2x256xf32>
    %18 = vector.broadcast %16 : vector<2x1xf32> to vector<2x256xf32>
    %19 = arith.mulf %18, %17 : vector<2x256xf32>
    %20 = arith.addf %15, %19 : vector<2x256xf32>
    %21 = vector.extract_strided_slice %8 {offsets = [0, 7], sizes = [2, 1], strides = [1, 1]} : vector<2x49xf32> to vector<2x1xf32>
    %22 = vector.extract_strided_slice %13 {offsets = [0, 16], sizes = [2, 256], strides = [1, 1]} : vector<2x358xf32> to vector<2x256xf32>
    %23 = vector.broadcast %21 : vector<2x1xf32> to vector<2x256xf32>
    %24 = arith.mulf %23, %22 : vector<2x256xf32>
    %25 = arith.addf %20, %24 : vector<2x256xf32>
    %26 = vector.extract_strided_slice %8 {offsets = [0, 14], sizes = [2, 1], strides = [1, 1]} : vector<2x49xf32> to vector<2x1xf32>
    %27 = vector.extract_strided_slice %13 {offsets = [0, 32], sizes = [2, 256], strides = [1, 1]} : vector<2x358xf32> to vector<2x256xf32>
    %28 = vector.broadcast %26 : vector<2x1xf32> to vector<2x256xf32>
    %29 = arith.mulf %28, %27 : vector<2x256xf32>
    %30 = arith.addf %25, %29 : vector<2x256xf32>
    %31 = vector.extract_strided_slice %8 {offsets = [0, 21], sizes = [2, 1], strides = [1, 1]} : vector<2x49xf32> to vector<2x1xf32>
    %32 = vector.extract_strided_slice %13 {offsets = [0, 48], sizes = [2, 256], strides = [1, 1]} : vector<2x358xf32> to vector<2x256xf32>
    %33 = vector.broadcast %31 : vector<2x1xf32> to vector<2x256xf32>
    %34 = arith.mulf %33, %32 : vector<2x256xf32>
    %35 = arith.addf %30, %34 : vector<2x256xf32>
    %36 = vector.extract_strided_slice %8 {offsets = [0, 28], sizes = [2, 1], strides = [1, 1]} : vector<2x49xf32> to vector<2x1xf32>
    %37 = vector.extract_strided_slice %13 {offsets = [0, 64], sizes = [2, 256], strides = [1, 1]} : vector<2x358xf32> to vector<2x256xf32>
    %38 = vector.broadcast %36 : vector<2x1xf32> to vector<2x256xf32>
    %39 = arith.mulf %38, %37 : vector<2x256xf32>
    %40 = arith.addf %35, %39 : vector<2x256xf32>
    %41 = vector.extract_strided_slice %8 {offsets = [0, 35], sizes = [2, 1], strides = [1, 1]} : vector<2x49xf32> to vector<2x1xf32>
    %42 = vector.extract_strided_slice %13 {offsets = [0, 80], sizes = [2, 256], strides = [1, 1]} : vector<2x358xf32> to vector<2x256xf32>
    %43 = vector.broadcast %41 : vector<2x1xf32> to vector<2x256xf32>
    %44 = arith.mulf %43, %42 : vector<2x256xf32>
    %45 = arith.addf %40, %44 : vector<2x256xf32>
    %46 = vector.extract_strided_slice %8 {offsets = [0, 42], sizes = [2, 1], strides = [1, 1]} : vector<2x49xf32> to vector<2x1xf32>
    %47 = vector.extract_strided_slice %13 {offsets = [0, 96], sizes = [2, 256], strides = [1, 1]} : vector<2x358xf32> to vector<2x256xf32>
    %48 = vector.broadcast %46 : vector<2x1xf32> to vector<2x256xf32>
    %49 = arith.mulf %48, %47 : vector<2x256xf32>
    %50 = arith.addf %45, %49 : vector<2x256xf32>
    %c3_i32 = arith.constant 3 : i32
    %51 = vector.broadcast %c3_i32 : i32 to vector<1x256xi32>
    %52 = arith.cmpi sge, %10, %51 : vector<1x256xi32>
    %cst_12 = arith.constant 0.000000e+00 : f32
    %53 = vector.shape_cast %52 : vector<1x256xi1> to vector<1x256xi1>
    %54 = vector.broadcast %53 : vector<1x256xi1> to vector<2x256xi1>
    %55 = vector.broadcast %cst_12 : f32 to vector<2x256xf32>
    %56 = arith.select %54, %50, %55 : vector<2x256xi1>, vector<2x256xf32>
    %57 = arith.addf %14, %56 : vector<2x256xf32>
    %cst_13 = arith.constant 0.000000e+00 : f32
    %58 = vector.broadcast %cst_13 : f32 to vector<2x256xf32>
    %59 = vector.extract_strided_slice %8 {offsets = [0, 1], sizes = [2, 1], strides = [1, 1]} : vector<2x49xf32> to vector<2x1xf32>
    %60 = vector.extract_strided_slice %13 {offsets = [0, 1], sizes = [2, 256], strides = [1, 1]} : vector<2x358xf32> to vector<2x256xf32>
    %61 = vector.broadcast %59 : vector<2x1xf32> to vector<2x256xf32>
    %62 = arith.mulf %61, %60 : vector<2x256xf32>
    %63 = arith.addf %58, %62 : vector<2x256xf32>
    %64 = vector.extract_strided_slice %8 {offsets = [0, 8], sizes = [2, 1], strides = [1, 1]} : vector<2x49xf32> to vector<2x1xf32>
    %65 = vector.extract_strided_slice %13 {offsets = [0, 17], sizes = [2, 256], strides = [1, 1]} : vector<2x358xf32> to vector<2x256xf32>
    %66 = vector.broadcast %64 : vector<2x1xf32> to vector<2x256xf32>
    %67 = arith.mulf %66, %65 : vector<2x256xf32>
    %68 = arith.addf %63, %67 : vector<2x256xf32>
    %69 = vector.extract_strided_slice %8 {offsets = [0, 15], sizes = [2, 1], strides = [1, 1]} : vector<2x49xf32> to vector<2x1xf32>
    %70 = vector.extract_strided_slice %13 {offsets = [0, 33], sizes = [2, 256], strides = [1, 1]} : vector<2x358xf32> to vector<2x256xf32>
    %71 = vector.broadcast %69 : vector<2x1xf32> to vector<2x256xf32>
    %72 = arith.mulf %71, %70 : vector<2x256xf32>
    %73 = arith.addf %68, %72 : vector<2x256xf32>
    %74 = vector.extract_strided_slice %8 {offsets = [0, 22], sizes = [2, 1], strides = [1, 1]} : vector<2x49xf32> to vector<2x1xf32>
    %75 = vector.extract_strided_slice %13 {offsets = [0, 49], sizes = [2, 256], strides = [1, 1]} : vector<2x358xf32> to vector<2x256xf32>
    %76 = vector.broadcast %74 : vector<2x1xf32> to vector<2x256xf32>
    %77 = arith.mulf %76, %75 : vector<2x256xf32>
    %78 = arith.addf %73, %77 : vector<2x256xf32>
    %79 = vector.extract_strided_slice %8 {offsets = [0, 29], sizes = [2, 1], strides = [1, 1]} : vector<2x49xf32> to vector<2x1xf32>
    %80 = vector.extract_strided_slice %13 {offsets = [0, 65], sizes = [2, 256], strides = [1, 1]} : vector<2x358xf32> to vector<2x256xf32>
    %81 = vector.broadcast %79 : vector<2x1xf32> to vector<2x256xf32>
    %82 = arith.mulf %81, %80 : vector<2x256xf32>
    %83 = arith.addf %78, %82 : vector<2x256xf32>
    %84 = vector.extract_strided_slice %8 {offsets = [0, 36], sizes = [2, 1], strides = [1, 1]} : vector<2x49xf32> to vector<2x1xf32>
    %85 = vector.extract_strided_slice %13 {offsets = [0, 81], sizes = [2, 256], strides = [1, 1]} : vector<2x358xf32> to vector<2x256xf32>
    %86 = vector.broadcast %84 : vector<2x1xf32> to vector<2x256xf32>
    %87 = arith.mulf %86, %85 : vector<2x256xf32>
    %88 = arith.addf %83, %87 : vector<2x256xf32>
    %89 = vector.extract_strided_slice %8 {offsets = [0, 43], sizes = [2, 1], strides = [1, 1]} : vector<2x49xf32> to vector<2x1xf32>
    %90 = vector.extract_strided_slice %13 {offsets = [0, 97], sizes = [2, 256], strides = [1, 1]} : vector<2x358xf32> to vector<2x256xf32>
    %91 = vector.broadcast %89 : vector<2x1xf32> to vector<2x256xf32>
    %92 = arith.mulf %91, %90 : vector<2x256xf32>
    %93 = arith.addf %88, %92 : vector<2x256xf32>
    %c2_i32 = arith.constant 2 : i32
    %94 = vector.broadcast %c2_i32 : i32 to vector<1x256xi32>
    %95 = arith.cmpi sge, %10, %94 : vector<1x256xi32>
    %cst_14 = arith.constant 0.000000e+00 : f32
    %96 = vector.shape_cast %95 : vector<1x256xi1> to vector<1x256xi1>
    %97 = vector.broadcast %96 : vector<1x256xi1> to vector<2x256xi1>
    %98 = vector.broadcast %cst_14 : f32 to vector<2x256xf32>
    %99 = arith.select %97, %93, %98 : vector<2x256xi1>, vector<2x256xf32>
    %100 = arith.addf %57, %99 : vector<2x256xf32>
    %cst_15 = arith.constant 0.000000e+00 : f32
    %101 = vector.broadcast %cst_15 : f32 to vector<2x256xf32>
    %102 = vector.extract_strided_slice %8 {offsets = [0, 2], sizes = [2, 1], strides = [1, 1]} : vector<2x49xf32> to vector<2x1xf32>
    %103 = vector.extract_strided_slice %13 {offsets = [0, 2], sizes = [2, 256], strides = [1, 1]} : vector<2x358xf32> to vector<2x256xf32>
    %104 = vector.broadcast %102 : vector<2x1xf32> to vector<2x256xf32>
    %105 = arith.mulf %104, %103 : vector<2x256xf32>
    %106 = arith.addf %101, %105 : vector<2x256xf32>
    %107 = vector.extract_strided_slice %8 {offsets = [0, 9], sizes = [2, 1], strides = [1, 1]} : vector<2x49xf32> to vector<2x1xf32>
    %108 = vector.extract_strided_slice %13 {offsets = [0, 18], sizes = [2, 256], strides = [1, 1]} : vector<2x358xf32> to vector<2x256xf32>
    %109 = vector.broadcast %107 : vector<2x1xf32> to vector<2x256xf32>
    %110 = arith.mulf %109, %108 : vector<2x256xf32>
    %111 = arith.addf %106, %110 : vector<2x256xf32>
    %112 = vector.extract_strided_slice %8 {offsets = [0, 16], sizes = [2, 1], strides = [1, 1]} : vector<2x49xf32> to vector<2x1xf32>
    %113 = vector.extract_strided_slice %13 {offsets = [0, 34], sizes = [2, 256], strides = [1, 1]} : vector<2x358xf32> to vector<2x256xf32>
    %114 = vector.broadcast %112 : vector<2x1xf32> to vector<2x256xf32>
    %115 = arith.mulf %114, %113 : vector<2x256xf32>
    %116 = arith.addf %111, %115 : vector<2x256xf32>
    %117 = vector.extract_strided_slice %8 {offsets = [0, 23], sizes = [2, 1], strides = [1, 1]} : vector<2x49xf32> to vector<2x1xf32>
    %118 = vector.extract_strided_slice %13 {offsets = [0, 50], sizes = [2, 256], strides = [1, 1]} : vector<2x358xf32> to vector<2x256xf32>
    %119 = vector.broadcast %117 : vector<2x1xf32> to vector<2x256xf32>
    %120 = arith.mulf %119, %118 : vector<2x256xf32>
    %121 = arith.addf %116, %120 : vector<2x256xf32>
    %122 = vector.extract_strided_slice %8 {offsets = [0, 30], sizes = [2, 1], strides = [1, 1]} : vector<2x49xf32> to vector<2x1xf32>
    %123 = vector.extract_strided_slice %13 {offsets = [0, 66], sizes = [2, 256], strides = [1, 1]} : vector<2x358xf32> to vector<2x256xf32>
    %124 = vector.broadcast %122 : vector<2x1xf32> to vector<2x256xf32>
    %125 = arith.mulf %124, %123 : vector<2x256xf32>
    %126 = arith.addf %121, %125 : vector<2x256xf32>
    %127 = vector.extract_strided_slice %8 {offsets = [0, 37], sizes = [2, 1], strides = [1, 1]} : vector<2x49xf32> to vector<2x1xf32>
    %128 = vector.extract_strided_slice %13 {offsets = [0, 82], sizes = [2, 256], strides = [1, 1]} : vector<2x358xf32> to vector<2x256xf32>
    %129 = vector.broadcast %127 : vector<2x1xf32> to vector<2x256xf32>
    %130 = arith.mulf %129, %128 : vector<2x256xf32>
    %131 = arith.addf %126, %130 : vector<2x256xf32>
    %132 = vector.extract_strided_slice %8 {offsets = [0, 44], sizes = [2, 1], strides = [1, 1]} : vector<2x49xf32> to vector<2x1xf32>
    %133 = vector.extract_strided_slice %13 {offsets = [0, 98], sizes = [2, 256], strides = [1, 1]} : vector<2x358xf32> to vector<2x256xf32>
    %134 = vector.broadcast %132 : vector<2x1xf32> to vector<2x256xf32>
    %135 = arith.mulf %134, %133 : vector<2x256xf32>
    %136 = arith.addf %131, %135 : vector<2x256xf32>
    %c1_i32 = arith.constant 1 : i32
    %137 = vector.broadcast %c1_i32 : i32 to vector<1x256xi32>
    %138 = arith.cmpi sge, %10, %137 : vector<1x256xi32>
    %cst_16 = arith.constant 0.000000e+00 : f32
    %139 = vector.shape_cast %138 : vector<1x256xi1> to vector<1x256xi1>
    %140 = vector.broadcast %139 : vector<1x256xi1> to vector<2x256xi1>
    %141 = vector.broadcast %cst_16 : f32 to vector<2x256xf32>
    %142 = arith.select %140, %136, %141 : vector<2x256xi1>, vector<2x256xf32>
    %143 = arith.addf %100, %142 : vector<2x256xf32>
    %cst_17 = arith.constant 0.000000e+00 : f32
    %144 = vector.broadcast %cst_17 : f32 to vector<2x256xf32>
    %145 = vector.extract_strided_slice %8 {offsets = [0, 3], sizes = [2, 1], strides = [1, 1]} : vector<2x49xf32> to vector<2x1xf32>
    %146 = vector.extract_strided_slice %13 {offsets = [0, 3], sizes = [2, 256], strides = [1, 1]} : vector<2x358xf32> to vector<2x256xf32>
    %147 = vector.broadcast %145 : vector<2x1xf32> to vector<2x256xf32>
    %148 = arith.mulf %147, %146 : vector<2x256xf32>
    %149 = arith.addf %144, %148 : vector<2x256xf32>
    %150 = vector.extract_strided_slice %8 {offsets = [0, 10], sizes = [2, 1], strides = [1, 1]} : vector<2x49xf32> to vector<2x1xf32>
    %151 = vector.extract_strided_slice %13 {offsets = [0, 19], sizes = [2, 256], strides = [1, 1]} : vector<2x358xf32> to vector<2x256xf32>
    %152 = vector.broadcast %150 : vector<2x1xf32> to vector<2x256xf32>
    %153 = arith.mulf %152, %151 : vector<2x256xf32>
    %154 = arith.addf %149, %153 : vector<2x256xf32>
    %155 = vector.extract_strided_slice %8 {offsets = [0, 17], sizes = [2, 1], strides = [1, 1]} : vector<2x49xf32> to vector<2x1xf32>
    %156 = vector.extract_strided_slice %13 {offsets = [0, 35], sizes = [2, 256], strides = [1, 1]} : vector<2x358xf32> to vector<2x256xf32>
    %157 = vector.broadcast %155 : vector<2x1xf32> to vector<2x256xf32>
    %158 = arith.mulf %157, %156 : vector<2x256xf32>
    %159 = arith.addf %154, %158 : vector<2x256xf32>
    %160 = vector.extract_strided_slice %8 {offsets = [0, 24], sizes = [2, 1], strides = [1, 1]} : vector<2x49xf32> to vector<2x1xf32>
    %161 = vector.extract_strided_slice %13 {offsets = [0, 51], sizes = [2, 256], strides = [1, 1]} : vector<2x358xf32> to vector<2x256xf32>
    %162 = vector.broadcast %160 : vector<2x1xf32> to vector<2x256xf32>
    %163 = arith.mulf %162, %161 : vector<2x256xf32>
    %164 = arith.addf %159, %163 : vector<2x256xf32>
    %165 = vector.extract_strided_slice %8 {offsets = [0, 31], sizes = [2, 1], strides = [1, 1]} : vector<2x49xf32> to vector<2x1xf32>
    %166 = vector.extract_strided_slice %13 {offsets = [0, 67], sizes = [2, 256], strides = [1, 1]} : vector<2x358xf32> to vector<2x256xf32>
    %167 = vector.broadcast %165 : vector<2x1xf32> to vector<2x256xf32>
    %168 = arith.mulf %167, %166 : vector<2x256xf32>
    %169 = arith.addf %164, %168 : vector<2x256xf32>
    %170 = vector.extract_strided_slice %8 {offsets = [0, 38], sizes = [2, 1], strides = [1, 1]} : vector<2x49xf32> to vector<2x1xf32>
    %171 = vector.extract_strided_slice %13 {offsets = [0, 83], sizes = [2, 256], strides = [1, 1]} : vector<2x358xf32> to vector<2x256xf32>
    %172 = vector.broadcast %170 : vector<2x1xf32> to vector<2x256xf32>
    %173 = arith.mulf %172, %171 : vector<2x256xf32>
    %174 = arith.addf %169, %173 : vector<2x256xf32>
    %175 = vector.extract_strided_slice %8 {offsets = [0, 45], sizes = [2, 1], strides = [1, 1]} : vector<2x49xf32> to vector<2x1xf32>
    %176 = vector.extract_strided_slice %13 {offsets = [0, 99], sizes = [2, 256], strides = [1, 1]} : vector<2x358xf32> to vector<2x256xf32>
    %177 = vector.broadcast %175 : vector<2x1xf32> to vector<2x256xf32>
    %178 = arith.mulf %177, %176 : vector<2x256xf32>
    %179 = arith.addf %174, %178 : vector<2x256xf32>
    %180 = arith.addf %143, %179 : vector<2x256xf32>
    %cst_18 = arith.constant 0.000000e+00 : f32
    %181 = vector.broadcast %cst_18 : f32 to vector<2x256xf32>
    %182 = vector.extract_strided_slice %8 {offsets = [0, 4], sizes = [2, 1], strides = [1, 1]} : vector<2x49xf32> to vector<2x1xf32>
    %183 = vector.extract_strided_slice %13 {offsets = [0, 4], sizes = [2, 256], strides = [1, 1]} : vector<2x358xf32> to vector<2x256xf32>
    %184 = vector.broadcast %182 : vector<2x1xf32> to vector<2x256xf32>
    %185 = arith.mulf %184, %183 : vector<2x256xf32>
    %186 = arith.addf %181, %185 : vector<2x256xf32>
    %187 = vector.extract_strided_slice %8 {offsets = [0, 11], sizes = [2, 1], strides = [1, 1]} : vector<2x49xf32> to vector<2x1xf32>
    %188 = vector.extract_strided_slice %13 {offsets = [0, 20], sizes = [2, 256], strides = [1, 1]} : vector<2x358xf32> to vector<2x256xf32>
    %189 = vector.broadcast %187 : vector<2x1xf32> to vector<2x256xf32>
    %190 = arith.mulf %189, %188 : vector<2x256xf32>
    %191 = arith.addf %186, %190 : vector<2x256xf32>
    %192 = vector.extract_strided_slice %8 {offsets = [0, 18], sizes = [2, 1], strides = [1, 1]} : vector<2x49xf32> to vector<2x1xf32>
    %193 = vector.extract_strided_slice %13 {offsets = [0, 36], sizes = [2, 256], strides = [1, 1]} : vector<2x358xf32> to vector<2x256xf32>
    %194 = vector.broadcast %192 : vector<2x1xf32> to vector<2x256xf32>
    %195 = arith.mulf %194, %193 : vector<2x256xf32>
    %196 = arith.addf %191, %195 : vector<2x256xf32>
    %197 = vector.extract_strided_slice %8 {offsets = [0, 25], sizes = [2, 1], strides = [1, 1]} : vector<2x49xf32> to vector<2x1xf32>
    %198 = vector.extract_strided_slice %13 {offsets = [0, 52], sizes = [2, 256], strides = [1, 1]} : vector<2x358xf32> to vector<2x256xf32>
    %199 = vector.broadcast %197 : vector<2x1xf32> to vector<2x256xf32>
    %200 = arith.mulf %199, %198 : vector<2x256xf32>
    %201 = arith.addf %196, %200 : vector<2x256xf32>
    %202 = vector.extract_strided_slice %8 {offsets = [0, 32], sizes = [2, 1], strides = [1, 1]} : vector<2x49xf32> to vector<2x1xf32>
    %203 = vector.extract_strided_slice %13 {offsets = [0, 68], sizes = [2, 256], strides = [1, 1]} : vector<2x358xf32> to vector<2x256xf32>
    %204 = vector.broadcast %202 : vector<2x1xf32> to vector<2x256xf32>
    %205 = arith.mulf %204, %203 : vector<2x256xf32>
    %206 = arith.addf %201, %205 : vector<2x256xf32>
    %207 = vector.extract_strided_slice %8 {offsets = [0, 39], sizes = [2, 1], strides = [1, 1]} : vector<2x49xf32> to vector<2x1xf32>
    %208 = vector.extract_strided_slice %13 {offsets = [0, 84], sizes = [2, 256], strides = [1, 1]} : vector<2x358xf32> to vector<2x256xf32>
    %209 = vector.broadcast %207 : vector<2x1xf32> to vector<2x256xf32>
    %210 = arith.mulf %209, %208 : vector<2x256xf32>
    %211 = arith.addf %206, %210 : vector<2x256xf32>
    %212 = vector.extract_strided_slice %8 {offsets = [0, 46], sizes = [2, 1], strides = [1, 1]} : vector<2x49xf32> to vector<2x1xf32>
    %213 = vector.extract_strided_slice %13 {offsets = [0, 100], sizes = [2, 256], strides = [1, 1]} : vector<2x358xf32> to vector<2x256xf32>
    %214 = vector.broadcast %212 : vector<2x1xf32> to vector<2x256xf32>
    %215 = arith.mulf %214, %213 : vector<2x256xf32>
    %216 = arith.addf %211, %215 : vector<2x256xf32>
    %c15_i32 = arith.constant 15 : i32
    %217 = vector.broadcast %c15_i32 : i32 to vector<1x256xi32>
    %218 = arith.cmpi slt, %10, %217 : vector<1x256xi32>
    %cst_19 = arith.constant 0.000000e+00 : f32
    %219 = vector.shape_cast %218 : vector<1x256xi1> to vector<1x256xi1>
    %220 = vector.broadcast %219 : vector<1x256xi1> to vector<2x256xi1>
    %221 = vector.broadcast %cst_19 : f32 to vector<2x256xf32>
    %222 = arith.select %220, %216, %221 : vector<2x256xi1>, vector<2x256xf32>
    %223 = arith.addf %180, %222 : vector<2x256xf32>
    %cst_20 = arith.constant 0.000000e+00 : f32
    %224 = vector.broadcast %cst_20 : f32 to vector<2x256xf32>
    %225 = vector.extract_strided_slice %8 {offsets = [0, 5], sizes = [2, 1], strides = [1, 1]} : vector<2x49xf32> to vector<2x1xf32>
    %226 = vector.extract_strided_slice %13 {offsets = [0, 5], sizes = [2, 256], strides = [1, 1]} : vector<2x358xf32> to vector<2x256xf32>
    %227 = vector.broadcast %225 : vector<2x1xf32> to vector<2x256xf32>
    %228 = arith.mulf %227, %226 : vector<2x256xf32>
    %229 = arith.addf %224, %228 : vector<2x256xf32>
    %230 = vector.extract_strided_slice %8 {offsets = [0, 12], sizes = [2, 1], strides = [1, 1]} : vector<2x49xf32> to vector<2x1xf32>
    %231 = vector.extract_strided_slice %13 {offsets = [0, 21], sizes = [2, 256], strides = [1, 1]} : vector<2x358xf32> to vector<2x256xf32>
    %232 = vector.broadcast %230 : vector<2x1xf32> to vector<2x256xf32>
    %233 = arith.mulf %232, %231 : vector<2x256xf32>
    %234 = arith.addf %229, %233 : vector<2x256xf32>
    %235 = vector.extract_strided_slice %8 {offsets = [0, 19], sizes = [2, 1], strides = [1, 1]} : vector<2x49xf32> to vector<2x1xf32>
    %236 = vector.extract_strided_slice %13 {offsets = [0, 37], sizes = [2, 256], strides = [1, 1]} : vector<2x358xf32> to vector<2x256xf32>
    %237 = vector.broadcast %235 : vector<2x1xf32> to vector<2x256xf32>
    %238 = arith.mulf %237, %236 : vector<2x256xf32>
    %239 = arith.addf %234, %238 : vector<2x256xf32>
    %240 = vector.extract_strided_slice %8 {offsets = [0, 26], sizes = [2, 1], strides = [1, 1]} : vector<2x49xf32> to vector<2x1xf32>
    %241 = vector.extract_strided_slice %13 {offsets = [0, 53], sizes = [2, 256], strides = [1, 1]} : vector<2x358xf32> to vector<2x256xf32>
    %242 = vector.broadcast %240 : vector<2x1xf32> to vector<2x256xf32>
    %243 = arith.mulf %242, %241 : vector<2x256xf32>
    %244 = arith.addf %239, %243 : vector<2x256xf32>
    %245 = vector.extract_strided_slice %8 {offsets = [0, 33], sizes = [2, 1], strides = [1, 1]} : vector<2x49xf32> to vector<2x1xf32>
    %246 = vector.extract_strided_slice %13 {offsets = [0, 69], sizes = [2, 256], strides = [1, 1]} : vector<2x358xf32> to vector<2x256xf32>
    %247 = vector.broadcast %245 : vector<2x1xf32> to vector<2x256xf32>
    %248 = arith.mulf %247, %246 : vector<2x256xf32>
    %249 = arith.addf %244, %248 : vector<2x256xf32>
    %250 = vector.extract_strided_slice %8 {offsets = [0, 40], sizes = [2, 1], strides = [1, 1]} : vector<2x49xf32> to vector<2x1xf32>
    %251 = vector.extract_strided_slice %13 {offsets = [0, 85], sizes = [2, 256], strides = [1, 1]} : vector<2x358xf32> to vector<2x256xf32>
    %252 = vector.broadcast %250 : vector<2x1xf32> to vector<2x256xf32>
    %253 = arith.mulf %252, %251 : vector<2x256xf32>
    %254 = arith.addf %249, %253 : vector<2x256xf32>
    %255 = vector.extract_strided_slice %8 {offsets = [0, 47], sizes = [2, 1], strides = [1, 1]} : vector<2x49xf32> to vector<2x1xf32>
    %256 = vector.extract_strided_slice %13 {offsets = [0, 101], sizes = [2, 256], strides = [1, 1]} : vector<2x358xf32> to vector<2x256xf32>
    %257 = vector.broadcast %255 : vector<2x1xf32> to vector<2x256xf32>
    %258 = arith.mulf %257, %256 : vector<2x256xf32>
    %259 = arith.addf %254, %258 : vector<2x256xf32>
    %c14_i32 = arith.constant 14 : i32
    %260 = vector.broadcast %c14_i32 : i32 to vector<1x256xi32>
    %261 = arith.cmpi slt, %10, %260 : vector<1x256xi32>
    %cst_21 = arith.constant 0.000000e+00 : f32
    %262 = vector.shape_cast %261 : vector<1x256xi1> to vector<1x256xi1>
    %263 = vector.broadcast %262 : vector<1x256xi1> to vector<2x256xi1>
    %264 = vector.broadcast %cst_21 : f32 to vector<2x256xf32>
    %265 = arith.select %263, %259, %264 : vector<2x256xi1>, vector<2x256xf32>
    %266 = arith.addf %223, %265 : vector<2x256xf32>
    %cst_22 = arith.constant 0.000000e+00 : f32
    %267 = vector.broadcast %cst_22 : f32 to vector<2x256xf32>
    %268 = vector.extract_strided_slice %8 {offsets = [0, 6], sizes = [2, 1], strides = [1, 1]} : vector<2x49xf32> to vector<2x1xf32>
    %269 = vector.extract_strided_slice %13 {offsets = [0, 6], sizes = [2, 256], strides = [1, 1]} : vector<2x358xf32> to vector<2x256xf32>
    %270 = vector.broadcast %268 : vector<2x1xf32> to vector<2x256xf32>
    %271 = arith.mulf %270, %269 : vector<2x256xf32>
    %272 = arith.addf %267, %271 : vector<2x256xf32>
    %273 = vector.extract_strided_slice %8 {offsets = [0, 13], sizes = [2, 1], strides = [1, 1]} : vector<2x49xf32> to vector<2x1xf32>
    %274 = vector.extract_strided_slice %13 {offsets = [0, 22], sizes = [2, 256], strides = [1, 1]} : vector<2x358xf32> to vector<2x256xf32>
    %275 = vector.broadcast %273 : vector<2x1xf32> to vector<2x256xf32>
    %276 = arith.mulf %275, %274 : vector<2x256xf32>
    %277 = arith.addf %272, %276 : vector<2x256xf32>
    %278 = vector.extract_strided_slice %8 {offsets = [0, 20], sizes = [2, 1], strides = [1, 1]} : vector<2x49xf32> to vector<2x1xf32>
    %279 = vector.extract_strided_slice %13 {offsets = [0, 38], sizes = [2, 256], strides = [1, 1]} : vector<2x358xf32> to vector<2x256xf32>
    %280 = vector.broadcast %278 : vector<2x1xf32> to vector<2x256xf32>
    %281 = arith.mulf %280, %279 : vector<2x256xf32>
    %282 = arith.addf %277, %281 : vector<2x256xf32>
    %283 = vector.extract_strided_slice %8 {offsets = [0, 27], sizes = [2, 1], strides = [1, 1]} : vector<2x49xf32> to vector<2x1xf32>
    %284 = vector.extract_strided_slice %13 {offsets = [0, 54], sizes = [2, 256], strides = [1, 1]} : vector<2x358xf32> to vector<2x256xf32>
    %285 = vector.broadcast %283 : vector<2x1xf32> to vector<2x256xf32>
    %286 = arith.mulf %285, %284 : vector<2x256xf32>
    %287 = arith.addf %282, %286 : vector<2x256xf32>
    %288 = vector.extract_strided_slice %8 {offsets = [0, 34], sizes = [2, 1], strides = [1, 1]} : vector<2x49xf32> to vector<2x1xf32>
    %289 = vector.extract_strided_slice %13 {offsets = [0, 70], sizes = [2, 256], strides = [1, 1]} : vector<2x358xf32> to vector<2x256xf32>
    %290 = vector.broadcast %288 : vector<2x1xf32> to vector<2x256xf32>
    %291 = arith.mulf %290, %289 : vector<2x256xf32>
    %292 = arith.addf %287, %291 : vector<2x256xf32>
    %293 = vector.extract_strided_slice %8 {offsets = [0, 41], sizes = [2, 1], strides = [1, 1]} : vector<2x49xf32> to vector<2x1xf32>
    %294 = vector.extract_strided_slice %13 {offsets = [0, 86], sizes = [2, 256], strides = [1, 1]} : vector<2x358xf32> to vector<2x256xf32>
    %295 = vector.broadcast %293 : vector<2x1xf32> to vector<2x256xf32>
    %296 = arith.mulf %295, %294 : vector<2x256xf32>
    %297 = arith.addf %292, %296 : vector<2x256xf32>
    %298 = vector.extract_strided_slice %8 {offsets = [0, 48], sizes = [2, 1], strides = [1, 1]} : vector<2x49xf32> to vector<2x1xf32>
    %299 = vector.extract_strided_slice %13 {offsets = [0, 102], sizes = [2, 256], strides = [1, 1]} : vector<2x358xf32> to vector<2x256xf32>
    %300 = vector.broadcast %298 : vector<2x1xf32> to vector<2x256xf32>
    %301 = arith.mulf %300, %299 : vector<2x256xf32>
    %302 = arith.addf %297, %301 : vector<2x256xf32>
    %c13_i32 = arith.constant 13 : i32
    %303 = vector.broadcast %c13_i32 : i32 to vector<1x256xi32>
    %304 = arith.cmpi slt, %10, %303 : vector<1x256xi32>
    %cst_23 = arith.constant 0.000000e+00 : f32
    %305 = vector.shape_cast %304 : vector<1x256xi1> to vector<1x256xi1>
    %306 = vector.broadcast %305 : vector<1x256xi1> to vector<2x256xi1>
    %307 = vector.broadcast %cst_23 : f32 to vector<2x256xf32>
    %308 = arith.select %306, %302, %307 : vector<2x256xi1>, vector<2x256xf32>
    %309 = arith.addf %266, %308 : vector<2x256xf32>
    %cst_24 = arith.constant dense<0.000000e+00> : vector<256xf32>
    %310 = vector.multi_reduction <add>, %309, %cst_24 [0] : vector<2x256xf32> to vector<256xf32>
    %311 = vector.shape_cast %310 : vector<256xf32> to vector<1x256xf32>
    %312 = vector.broadcast %9 : f32 to vector<1x256xf32>
    %313 = arith.addf %311, %312 : vector<1x256xf32>
    %cst_25 = arith.constant 0.000000e+00 : f32
    %314 = vector.broadcast %cst_25 : f32 to vector<1x256xf32>
    %315 = arith.subf %314, %313 : vector<1x256xf32>
    %316 = math.exp %315 : vector<1x256xf32>
    %cst_26 = arith.constant 1.000000e+00 : f32
    %317 = vector.broadcast %cst_26 : f32 to vector<1x256xf32>
    %318 = arith.addf %317, %316 : vector<1x256xf32>
    %319 = tpu.reciprocal %318 {approx = true} : vector<1x256xf32> -> vector<1x256xf32>
    %c0_27 = arith.constant 0 : index
    %c0_28 = arith.constant 0 : index
    %c0_29 = arith.constant 0 : index
    %320 = vector.load %arg4[%c0_27, %c0_28, %c0_29] : memref<1x4x256xf32, #tpu.memory_space<vmem>>, vector<1x4x256xf32>
    %321 = vector.shape_cast %320 : vector<1x4x256xf32> to vector<4x256xf32>
    %322 = vector.broadcast %319 : vector<1x256xf32> to vector<4x256xf32>
    %323 = arith.mulf %321, %322 : vector<4x256xf32>
    %c0_30 = arith.constant 0 : index
    %c0_31 = arith.constant 0 : index
    %c0_32 = arith.constant 0 : index
    %324 = vector.load %arg5[%c0_30, %c0_31, %c0_32] : memref<1x4x256xf32, #tpu.memory_space<vmem>>, vector<1x4x256xf32>
    %325 = vector.shape_cast %324 : vector<1x4x256xf32> to vector<4x256xf32>
    %326 = vector.shape_cast %323 : vector<4x256xf32> to vector<1x4x256xf32>
    tpu.vector_store %arg5[%c0_30, %c0_31, %c0_32], %326 {strides = array<i32>} : memref<1x4x256xf32, #tpu.memory_space<vmem>>, vector<1x4x256xf32>,
    return
  }
  func.func @transform_0(%arg0: i32) -> (i32, i32) {
    %c0_i32 = arith.constant 0 : i32
    %c0_i32_0 = arith.constant 0 : i32
    %c0_i32_1 = arith.constant 0 : i32
    return %c0_i32, %c0_i32_0 : i32, i32
  }
  func.func @transform_1(%arg0: i32) -> i32 {
    %c0_i32 = arith.constant 0 : i32
    %c0_i32_0 = arith.constant 0 : i32
    return %c0_i32 : i32
  }
  func.func @transform_2(%arg0: i32) -> (i32, i32) {
    %c0_i32 = arith.constant 0 : i32
    %c0_i32_0 = arith.constant 0 : i32
    %c0_i32_1 = arith.constant 0 : i32
    return %c0_i32, %c0_i32_0 : i32, i32
  }
  func.func @transform_3(%arg0: i32) -> (i32, i32, i32) {
    %c0_i32 = arith.constant 0 : i32
    %c0_i32_0 = arith.constant 0 : i32
    %c0_i32_1 = arith.constant 0 : i32
    return %arg0, %c0_i32, %c0_i32_0 : i32, i32, i32
  }
  func.func @transform_4(%arg0: i32) -> (i32, i32, i32) {
    %c0_i32 = arith.constant 0 : i32
    %c0_i32_0 = arith.constant 0 : i32
    %c0_i32_1 = arith.constant 0 : i32
    return %arg0, %c0_i32, %c0_i32_0 : i32, i32, i32
  }
}

</mosaic_0001>

<llo_original>
// kernel: tpu_custom_call.1
$region0: #{tpu_custom_call.1}
  #allocation0 [shape = 'u32[]', space=smem, size = 0x4, offset = 0x4, fixed_abs, tag = 'smem constant byte address 0x4 - core index']
  #allocation1 [shape = 'u32[144,128]{1,0:T(1,128)}', space=vmem, size = 0x12000, scoped, tag = 'internal scratch']
  #allocation2 [shape = 'f32[1]{0:T(128)S(6)}', space=smem, size = 0x200, scoped, tag = 'scoped memory for tpu_custom_call.1']
  %s0 = inlined_call_operand.vmem [shape: f32[2,49], index: 0, kind: input, shape index: {}]
  %s1 = inlined_call_operand.<no memory space> [shape: f32[1], index: 1, kind: input, shape index: {}]
  %s2 = inlined_call_operand.hbm [shape: s32[1,256], index: 2, kind: input, shape index: {}]
  %s3 = inlined_call_operand.hbm [shape: f32[2,4,256], index: 3, kind: input, shape index: {}]
  %s4 = inlined_call_operand.hbm [shape: f32[2,4,256], index: 4, kind: output, shape index: {}]
  %s5 = sld [smem:[#allocation0]]
  $region57: #{tpu_custom_call.1} parent=0
    _
  %s7 = ssub.s32 1, %s5
  %s8 = scalar_select 0, %s7, %s5
  %9 = sst [smem:[#allocation2]] %s1
  $region1: #{tpu_custom_call.1} parent=0
    #allocation3 [shape = 'u8[1024]{0}', space=vmem, size = 0x400, scoped, tag = 'input window, operand 2, single buffered']
    #allocation4 [shape = 's32[2]{0}', space=sflag, size = 0x8, scoped, tag = 'scoped memory for tpu_custom_call.1']
    #allocation5 [shape = 's32[2]{0}', space=sflag, size = 0x8, scoped, tag = 'scoped memory for tpu_custom_call.1']
    #allocation6 [shape = 'u8[8192]{0}', space=vmem, size = 0x2000, scoped, tag = 'input window, operand 3']
    #allocation7 [shape = 's32[2]{0}', space=sflag, size = 0x8, scoped, tag = 'scoped memory for tpu_custom_call.1']
    #allocation8 [shape = 'u8[8192]{0}', space=vmem, size = 0x2000, scoped, tag = 'output window, operand 0']
    %10 = vsyncpa [#allocation4], 0
    %11 = vsyncpa [#allocation7], 0
    %s12 = scalar_lea.sflag [#allocation7], 1
    %13 = vsyncpa %s12, 0
    %14 = vsyncpa [#allocation5], 0
    %s15 = scalar_lea.sflag [#allocation5], 1
    %16 = vsyncpa %s15, 0
    loop: start=0, step=1, limit=4
    $region2: #{tpu_custom_call.1} parent=1 // loop_pre_header
      _
    $region3: #{tpu_custom_call.1} parent=1 // loop_header
      %s18 = sphi 0, %s22
      %p19 = scmp.ge.s32.totalorder %s18, 4
      %s26 = sphi 0, %s26
      %s28 = sphi 0, %s26
      %s29 = sphi 0, %s28
      %s43 = sphi 0, %s29
      %s47 = sphi 0, %s47
      %s49 = sphi 0, %s47
      %s50 = sphi 0, %s49
      %s64 = sphi 0, %s50
      %s68 = sphi 0, %s68
      %s70 = sphi 0, %s68
      %s71 = sphi 0, %s70
      %s85 = sphi 0, %s71
      %s91 = sphi 0, %s93
      %s94 = sphi 0, %s91
      %s95 = sphi 0, %s94
      %s111 = sphi 0, %s95
      %s117 = sphi 0, %s119
      %s120 = sphi 0, %s117
      %s121 = sphi 0, %s120
      %s137 = sphi 0, %s121
    $region4: #{tpu_custom_call.1} parent=1 // loop_header_branch
      %21 = sbr.rel (%p19) target = $region8
    $region5: #{tpu_custom_call.1} parent=1 // loop_body
      %s23 = ssub.s32 %s18, 1
      %s24 = ssub.s32 %s18, 2
      %s25 = sadd.s32 %s18, 1
      %s27 = sadd.s32 %s26, 1
      %p30 = scmp.eq.s32.totalorder %s18, 1
      %p31 = scmp.ne.s32.totalorder %s26, %s28
      %p32 = scmp.eq.s32.totalorder %s18, 0
      %p33 = por %p31, %p32
      %p34 = scmp.ne.s32.totalorder %s26, %s28
      %p35 = scmp.eq.s32.totalorder %s23, 1
      %p36 = por %p34, %p35
      %p37 = scmp.ne.s32.totalorder %s28, %s29
      %p38 = scmp.eq.s32.totalorder %s23, 0
      %p39 = por %p37, %p38
      %p40 = scmp.ne.s32.totalorder %s28, %s29
      %p41 = scmp.eq.s32.totalorder %s24, 1
      %p42 = por %p40, %p41
      %p44 = scmp.ne.s32.totalorder %s29, %s43
      %p45 = scmp.eq.s32.totalorder %s24, 0
      %p46 = por %p44, %p45
      %s48 = sadd.s32 %s47, 1
      %p51 = scmp.eq.s32.totalorder %s18, 1
      %p52 = scmp.ne.s32.totalorder %s47, %s49
      %p53 = scmp.eq.s32.totalorder %s18, 0
      %p54 = por %p52, %p53
      %p55 = scmp.ne.s32.totalorder %s47, %s49
      %p56 = scmp.eq.s32.totalorder %s23, 1
      %p57 = por %p55, %p56
      %p58 = scmp.ne.s32.totalorder %s49, %s50
      %p59 = scmp.eq.s32.totalorder %s23, 0
      %p60 = por %p58, %p59
      %p61 = scmp.ne.s32.totalorder %s49, %s50
      %p62 = scmp.eq.s32.totalorder %s24, 1
      %p63 = por %p61, %p62
      %p65 = scmp.ne.s32.totalorder %s50, %s64
      %p66 = scmp.eq.s32.totalorder %s24, 0
      %p67 = por %p65, %p66
      %s69 = sadd.s32 %s68, 1
      %p72 = scmp.eq.s32.totalorder %s18, 1
      %p73 = scmp.ne.s32.totalorder %s68, %s70
      %p74 = scmp.eq.s32.totalorder %s18, 0
      %p75 = por %p73, %p74
      %p76 = scmp.ne.s32.totalorder %s68, %s70
      %p77 = scmp.eq.s32.totalorder %s23, 1
      %p78 = por %p76, %p77
      %p79 = scmp.ne.s32.totalorder %s70, %s71
      %p80 = scmp.eq.s32.totalorder %s23, 0
      %p81 = por %p79, %p80
      %p82 = scmp.ne.s32.totalorder %s70, %s71
      %p83 = scmp.eq.s32.totalorder %s24, 1
      %p84 = por %p82, %p83
      %p86 = scmp.ne.s32.totalorder %s71, %s85
      %p87 = scmp.eq.s32.totalorder %s24, 0
      %p88 = por %p86, %p87
      %s89 = ssub.s32 %s18, %s25
      %p90 = scmp.eq.s32.totalorder %s89, 0
      %s92 = sadd.s32 %s91, 1
      %s93 = scalar_select %p90, %s91, %s92
      %p96 = pneg %p90
      %p97 = scmp.eq.s32.totalorder %s18, 1
      %p98 = por %p96, %p97
      %p99 = scmp.ne.s32.totalorder %s91, %s94
      %p100 = scmp.eq.s32.totalorder %s18, 0
      %p101 = por %p99, %p100
      %p102 = scmp.ne.s32.totalorder %s91, %s94
      %p103 = scmp.eq.s32.totalorder %s23, 1
      %p104 = por %p102, %p103
      %p105 = scmp.ne.s32.totalorder %s94, %s95
      %p106 = scmp.eq.s32.totalorder %s23, 0
      %p107 = por %p105, %p106
      %p108 = scmp.ne.s32.totalorder %s94, %s95
      %p109 = scmp.eq.s32.totalorder %s24, 1
      %p110 = por %p108, %p109
      %p112 = scmp.ne.s32.totalorder %s95, %s111
      %p113 = scmp.eq.s32.totalorder %s24, 0
      %p114 = por %p112, %p113
      %s115 = ssub.s32 %s18, %s25
      %p116 = scmp.eq.s32.totalorder %s115, 0
      %s118 = sadd.s32 %s117, 1
      %s119 = scalar_select %p116, %s117, %s118
      %p122 = pneg %p116
      %p123 = scmp.eq.s32.totalorder %s18, 1
      %p124 = por %p122, %p123
      %p125 = scmp.ne.s32.totalorder %s117, %s120
      %p126 = scmp.eq.s32.totalorder %s18, 0
      %p127 = por %p125, %p126
      %p128 = scmp.ne.s32.totalorder %s117, %s120
      %p129 = scmp.eq.s32.totalorder %s23, 1
      %p130 = por %p128, %p129
      %p131 = scmp.ne.s32.totalorder %s120, %s121
      %p132 = scmp.eq.s32.totalorder %s23, 0
      %p133 = por %p131, %p132
      %p134 = scmp.ne.s32.totalorder %s120, %s121
      %p135 = scmp.eq.s32.totalorder %s24, 1
      %p136 = por %p134, %p135
      %p138 = scmp.ne.s32.totalorder %s121, %s137
      %p139 = scmp.eq.s32.totalorder %s24, 0
      %p140 = por %p138, %p139
      %p141 = scmp.le.s32.totalorder 1, %s18
      %p142 = scmp.lt.s32.totalorder %s18, 3
      %p143 = pnand %p141, %p142
      %p144 = pneg %p143
      // Predicated region
      $region9: #{tpu_custom_call.1} parent=5 // pred_check
        _
      $region10: #{tpu_custom_call.1} parent=5 // pred_check_branch
        %146 = sbr.rel (%p143) target = $region12
      $region11: #{tpu_custom_call.1} parent=5 // pred_region
        %s147 = ssub.s32 %s18, 1
        // Predicated region
        $region13: #{tpu_custom_call.1} parent=11 // pred_check
          %p148 = pneg %p39
        $region14: #{tpu_custom_call.1} parent=11 // pred_check_branch
          %150 = sbr.rel (%p148) target = $region16
        $region15: #{tpu_custom_call.1} parent=11 // pred_region
          _
        $region16: #{tpu_custom_call.1} parent=11 // pred_fallthru
          _
        // Predicated region
        $region17: #{tpu_custom_call.1} parent=11 // pred_check
          %p151 = pneg %p60
        $region18: #{tpu_custom_call.1} parent=11 // pred_check_branch
          %153 = sbr.rel (%p151) target = $region20
        $region19: #{tpu_custom_call.1} parent=11 // pred_region
          _
        $region20: #{tpu_custom_call.1} parent=11 // pred_fallthru
          _
        // Predicated region
        $region21: #{tpu_custom_call.1} parent=11 // pred_check
          %p154 = pneg %p81
        $region22: #{tpu_custom_call.1} parent=11 // pred_check_branch
          %156 = sbr.rel (%p154) target = $region24
        $region23: #{tpu_custom_call.1} parent=11 // pred_region
          %s158 = ssub.s32 32, 32
          %159 = vsyncadd [#allocation4], %s158
          %s161 = sshll.u32 [#allocation3], 4
          %s162 = int_to_ptr.vmem [resolvable:$true] %s161
          %164 = dma.hbm_to_vmem [thread:$0]  %s2, 32, %s162, [#allocation4]
        $region24: #{tpu_custom_call.1} parent=11 // pred_fallthru
          _
      $region12: #{tpu_custom_call.1} parent=5 // pred_fallthru
        _
      %p165 = scmp.lt.s32.totalorder %s18, 2
      // Predicated region
      $region25: #{tpu_custom_call.1} parent=5 // pred_check
        %p166 = pneg %p165
      $region26: #{tpu_custom_call.1} parent=5 // pred_check_branch
        %168 = sbr.rel (%p166) target = $region28
      $region27: #{tpu_custom_call.1} parent=5 // pred_region
        // Predicated region
        $region29: #{tpu_custom_call.1} parent=27 // pred_check
          %p169 = pneg %p101
        $region30: #{tpu_custom_call.1} parent=27 // pred_check_branch
          %171 = sbr.rel (%p169) target = $region32
        $region31: #{tpu_custom_call.1} parent=27 // pred_region
          %s172 = sand.u32 %s91, 1
          %s173 = scalar_lea.sflag [#allocation7], %s172
          %s174 = sand.u32 %s91, 1
          %s175 = smul.addr %s174, 8
          %s176 = scalar_lea.vmem [#allocation6], %s175
          %s178 = ssub.s32 128, 128
          %179 = vsyncadd %s173, %s178
          %s180 = smul.addr %s18, 2
          %s181 = smul.addr %s180, 64
          %s182 = scalar_lea.hbm %s3, %s181
          %s184 = sshll.u32 %s176, 4
          %s185 = int_to_ptr.vmem [resolvable:$true] %s184
          %187 = dma.hbm_to_vmem [thread:$0]  %s182, 128, %s185, %s173
        $region32: #{tpu_custom_call.1} parent=27 // pred_fallthru
          _
      $region28: #{tpu_custom_call.1} parent=5 // pred_fallthru
        _
      %p188 = scmp.le.s32.totalorder 1, %s18
      %p189 = scmp.lt.s32.totalorder %s18, 3
      %p190 = pnand %p188, %p189
      %p191 = pneg %p190
      // Predicated region
      $region33: #{tpu_custom_call.1} parent=5 // pred_check
        _
      $region34: #{tpu_custom_call.1} parent=5 // pred_check_branch
        %193 = sbr.rel (%p190) target = $region36
      $region35: #{tpu_custom_call.1} parent=5 // pred_region
        %s194 = ssub.s32 %s18, 1
        // Predicated region
        $region37: #{tpu_custom_call.1} parent=35 // pred_check
          %p195 = pneg %p81
        $region38: #{tpu_custom_call.1} parent=35 // pred_check_branch
          %197 = sbr.rel (%p195) target = $region40
        $region39: #{tpu_custom_call.1} parent=35 // pred_region
          %198 = dma.done [#allocation4], 32
        $region40: #{tpu_custom_call.1} parent=35 // pred_fallthru
          _
        %s199 = sand.u32 %s94, 1
        %s200 = scalar_lea.sflag [#allocation7], %s199
        %s201 = sand.u32 %s94, 1
        %s202 = smul.addr %s201, 8
        %s203 = scalar_lea.vmem [#allocation6], %s202
        // Predicated region
        $region41: #{tpu_custom_call.1} parent=35 // pred_check
          %p204 = pneg %p107
        $region42: #{tpu_custom_call.1} parent=35 // pred_check_branch
          %206 = sbr.rel (%p204) target = $region44
        $region43: #{tpu_custom_call.1} parent=35 // pred_region
          %207 = dma.done %s200, 128
        $region44: #{tpu_custom_call.1} parent=35 // pred_fallthru
          _
        %p208 = pneg %p39
        %p209 = pneg %p36
        %p210 = pneg %p60
        %p211 = pneg %p57
        %p212 = pneg %p81
        %p213 = pneg %p78
        %s214 = sand.u32 %s94, 1
        %s215 = scalar_lea.sflag [#allocation7], %s214
        %s216 = sand.u32 %s94, 1
        %s217 = smul.addr %s216, 8
        %s218 = scalar_lea.vmem [#allocation6], %s217
        %p219 = pneg %p107
        %p220 = pneg %p104
        %p221 = pneg %p133
        %p222 = pneg %p130
        %s223 = sand.u32 %s120, 1
        %s224 = scalar_lea.sflag [#allocation5], %s223
        %s225 = sand.u32 %s120, 1
        %s226 = smul.addr %s225, 8
        %s227 = scalar_lea.vmem [#allocation8], %s226
        %v228 = vld [vmem:[%s203] sm:$0xff]
        %v230 = vcombine.high %v228, %v228
        %vm232 = vcmask 1043456
        %v233 = vsel %vm232, %v228, 0.0
        %v234 = vrot.slane %v233, 4
        %v235 = vadd.f32 %v233, %v234
        %v236 = vrot.slane %v235, 2
        %v237 = vadd.f32 %v235, %v236
        %v238 = vrot.slane %v237, 1
        %v239 = vadd.f32 %v237, %v238
        %v240 = vsel %vm232, %v230, 0.0
        %v241 = vrot.slane %v240, 4
        %v242 = vadd.f32 %v240, %v241
        %v243 = vrot.slane %v242, 2
        %v244 = vadd.f32 %v242, %v243
        %v245 = vrot.slane %v244, 1
        %v246 = vadd.f32 %v244, %v245
        %v247 = vrcp.pop 4.0
        %v248 = vmul.f32 %v239, %v247
        %v249 = vmul.f32 %v246, %v247
        %v250 = vsel %vm232, %v228, -inf
        %v251 = vrot.slane %v250, 4
        %v252 = vmax.f32 %v250, %v251
        %v253 = vrot.slane %v252, 2
        %v254 = vmax.f32 %v252, %v253
        %v255 = vrot.slane %v254, 1
        %v256 = vmax.f32 %v254, %v255
        %v257 = vsel %vm232, %v230, -inf
        %v258 = vrot.slane %v257, 4
        %v259 = vmax.f32 %v257, %v258
        %v260 = vrot.slane %v259, 2
        %v261 = vmax.f32 %v259, %v260
        %v262 = vrot.slane %v261, 1
        %v263 = vmax.f32 %v261, %v262
        %v264 = vld [vmem:[%s0] sm:$0x3]
        %s265 = sld [smem:[#allocation2]]
        %v266 = vld [vmem:[#allocation3] sm:$0x3]
        %vm267 = vcmask 1040384
        %v268 = vsel %vm267, %v248, %v256
        %v269 = vsel %vm267, %v249, %v263
        %272 = vrot.lane.b32.xlu0 %v268, 51
        %v273 = vpop.permute.xlu0 %272
        %274 = vrot.lane.b32.xlu0 %v269, 51
        %v275 = vpop.permute.xlu0 %274
        %vm276 = vcmask 416768
        %v277 = vsel %vm276, %v273, %v275
        %v281 = vsel %vm276, 0.0, %v273
        %v282 = vsel %vm276, %v275, 0.0
        %284 = vset.pattern.permute.xlu0 0
        %285 = vperm.xlu0 %284, %v264
        %v286 = vpop.permute.xlu0 %285
        %v288 = vmul.f32 %v286, %v281
        %v289 = vmul.f32 %v286, %v277
        %v290 = vadd.f32 %v288, 0.0
        %v291 = vadd.f32 %v289, 0.0
        %292 = vset.pattern.permute.xlu0 7
        %293 = vperm.xlu0 %292, %v264
        %v294 = vpop.permute.xlu0 %293
        %v296 = vmul.f32 %v294, %v281
        %v297 = vmul.f32 %v294, %v277
        %v298 = vmul.f32 %v294, %v282
        %302 = vrot.lane.b32.xlu0 %v296, 112
        %v303 = vpop.permute.xlu0 %302
        %304 = vrot.lane.b32.xlu0 %v297, 112
        %v305 = vpop.permute.xlu0 %304
        %306 = vrot.lane.b32.xlu0 %v298, 112
        %v307 = vpop.permute.xlu0 %306
        %vm308 = vcmask 916480
        %v309 = vsel %vm308, %v303, %v305
        %v310 = vsel %vm308, %v305, %v307
        %v313 = vadd.f32 %v290, %v309
        %v314 = vadd.f32 %v291, %v310
        %315 = vset.pattern.permute.xlu0 14
        %316 = vperm.xlu0 %315, %v264
        %v317 = vpop.permute.xlu0 %316
        %v319 = vmul.f32 %v317, %v281
        %v320 = vmul.f32 %v317, %v277
        %v321 = vmul.f32 %v317, %v282
        %325 = vrot.lane.b32.xlu0 %v319, 96
        %v326 = vpop.permute.xlu0 %325
        %327 = vrot.lane.b32.xlu0 %v320, 96
        %v328 = vpop.permute.xlu0 %327
        %329 = vrot.lane.b32.xlu0 %v321, 96
        %v330 = vpop.permute.xlu0 %329
        %vm331 = vcmask 785408
        %v332 = vsel %vm331, %v326, %v328
        %v333 = vsel %vm331, %v328, %v330
        %v336 = vadd.f32 %v313, %v332
        %v337 = vadd.f32 %v314, %v333
        %338 = vset.pattern.permute.xlu0 21
        %339 = vperm.xlu0 %338, %v264
        %v340 = vpop.permute.xlu0 %339
        %v342 = vmul.f32 %v340, %v281
        %v343 = vmul.f32 %v340, %v277
        %v344 = vmul.f32 %v340, %v282
        %348 = vrot.lane.b32.xlu0 %v342, 80
        %v349 = vpop.permute.xlu0 %348
        %350 = vrot.lane.b32.xlu0 %v343, 80
        %v351 = vpop.permute.xlu0 %350
        %352 = vrot.lane.b32.xlu0 %v344, 80
        %v353 = vpop.permute.xlu0 %352
        %vm354 = vcmask 654336
        %v355 = vsel %vm354, %v349, %v351
        %v356 = vsel %vm354, %v351, %v353
        %v359 = vadd.f32 %v336, %v355
        %v360 = vadd.f32 %v337, %v356
        %361 = vset.pattern.permute.xlu0 28
        %362 = vperm.xlu0 %361, %v264
        %v363 = vpop.permute.xlu0 %362
        %v365 = vmul.f32 %v363, %v281
        %v366 = vmul.f32 %v363, %v277
        %v367 = vmul.f32 %v363, %v282
        %371 = vrot.lane.b32.xlu0 %v365, 64
        %v372 = vpop.permute.xlu0 %371
        %373 = vrot.lane.b32.xlu0 %v366, 64
        %v374 = vpop.permute.xlu0 %373
        %375 = vrot.lane.b32.xlu0 %v367, 64
        %v376 = vpop.permute.xlu0 %375
        %vm377 = vcmask 523264
        %v378 = vsel %vm377, %v372, %v374
        %v379 = vsel %vm377, %v374, %v376
        %v382 = vadd.f32 %v359, %v378
        %v383 = vadd.f32 %v360, %v379
        %384 = vset.pattern.permute.xlu0 35
        %385 = vperm.xlu0 %384, %v264
        %v386 = vpop.permute.xlu0 %385
        %v388 = vmul.f32 %v386, %v281
        %v389 = vmul.f32 %v386, %v277
        %v390 = vmul.f32 %v386, %v282
        %394 = vrot.lane.b32.xlu0 %v388, 48
        %v395 = vpop.permute.xlu0 %394
        %396 = vrot.lane.b32.xlu0 %v389, 48
        %v397 = vpop.permute.xlu0 %396
        %398 = vrot.lane.b32.xlu0 %v390, 48
        %v399 = vpop.permute.xlu0 %398
        %vm400 = vcmask 392192
        %v401 = vsel %vm400, %v395, %v397
        %v402 = vsel %vm400, %v397, %v399
        %v405 = vadd.f32 %v382, %v401
        %v406 = vadd.f32 %v383, %v402
        %407 = vset.pattern.permute.xlu0 42
        %408 = vperm.xlu0 %407, %v264
        %v409 = vpop.permute.xlu0 %408
        %v411 = vmul.f32 %v409, %v281
        %v412 = vmul.f32 %v409, %v277
        %v413 = vmul.f32 %v409, %v282
        %417 = vrot.lane.b32.xlu0 %v411, 32
        %v418 = vpop.permute.xlu0 %417
        %419 = vrot.lane.b32.xlu0 %v412, 32
        %v420 = vpop.permute.xlu0 %419
        %421 = vrot.lane.b32.xlu0 %v413, 32
        %v422 = vpop.permute.xlu0 %421
        %vm423 = vcmask 261120
        %v424 = vsel %vm423, %v418, %v420
        %v425 = vsel %vm423, %v420, %v422
        %v428 = vadd.f32 %v405, %v424
        %v429 = vadd.f32 %v406, %v425
        %vm430 = vcmp.ge.s32.totalorder %v266, 3
        %v431 = vsel %vm430, 1, 0
        %v432 = vlaneseq
        %v433 = vshrl.u32 %v432, 7
        %v434 = vsub.s32 0, %v433
        %v435 = vrot.slane %v431, %v434
        %v436 = vlaneseq
        %v437 = vshrl.u32 %v436, 7
        %v438 = vsub.s32 1, %v437
        %v439 = vrot.slane %v431, %v438
        %vm440 = vcmp.eq.s32.totalorder %v435, 1
        %vm441 = vcmp.eq.s32.totalorder %v439, 1
        %v442 = vsel %vm440, %v428, 0.0
        %v443 = vsel %vm441, %v429, 0.0
        %v444 = vadd.f32 %v442, 0.0
        %v445 = vadd.f32 %v443, 0.0
        %446 = vset.pattern.permute.xlu0 1
        %447 = vperm.xlu0 %446, %v264
        %v448 = vpop.permute.xlu0 %447
        %v450 = vmul.f32 %v448, %v281
        %v451 = vmul.f32 %v448, %v277
        %v452 = vmul.f32 %v448, %v282
        %v453 = vadd.f32 %v450, 0.0
        %v454 = vadd.f32 %v451, 0.0
        %v455 = vadd.f32 %v452, 0.0
        %456 = vset.pattern.permute.xlu0 8
        %457 = vperm.xlu0 %456, %v264
        %v458 = vpop.permute.xlu0 %457
        %v460 = vmul.f32 %v458, %v281
        %v461 = vmul.f32 %v458, %v277
        %v462 = vmul.f32 %v458, %v282
        %466 = vrot.lane.b32.xlu0 %v460, 112
        %v467 = vpop.permute.xlu0 %466
        %468 = vrot.lane.b32.xlu0 %v461, 112
        %v469 = vpop.permute.xlu0 %468
        %470 = vrot.lane.b32.xlu0 %v462, 112
        %v471 = vpop.permute.xlu0 %470
        %v472 = vsel %vm308, %v467, %v469
        %v473 = vsel %vm308, %v469, %v471
        %v477 = vadd.f32 %v453, %v472
        %v478 = vadd.f32 %v454, %v473
        %v479 = vadd.f32 %v455, %v471
        %480 = vset.pattern.permute.xlu0 15
        %481 = vperm.xlu0 %480, %v264
        %v482 = vpop.permute.xlu0 %481
        %v484 = vmul.f32 %v482, %v281
        %v485 = vmul.f32 %v482, %v277
        %v486 = vmul.f32 %v482, %v282
        %490 = vrot.lane.b32.xlu0 %v484, 96
        %v491 = vpop.permute.xlu0 %490
        %492 = vrot.lane.b32.xlu0 %v485, 96
        %v493 = vpop.permute.xlu0 %492
        %494 = vrot.lane.b32.xlu0 %v486, 96
        %v495 = vpop.permute.xlu0 %494
        %v496 = vsel %vm331, %v491, %v493
        %v497 = vsel %vm331, %v493, %v495
        %v501 = vadd.f32 %v477, %v496
        %v502 = vadd.f32 %v478, %v497
        %v503 = vadd.f32 %v479, %v495
        %504 = vset.pattern.permute.xlu0 22
        %505 = vperm.xlu0 %504, %v264
        %v506 = vpop.permute.xlu0 %505
        %v508 = vmul.f32 %v506, %v281
        %v509 = vmul.f32 %v506, %v277
        %v510 = vmul.f32 %v506, %v282
        %514 = vrot.lane.b32.xlu0 %v508, 80
        %v515 = vpop.permute.xlu0 %514
        %516 = vrot.lane.b32.xlu0 %v509, 80
        %v517 = vpop.permute.xlu0 %516
        %518 = vrot.lane.b32.xlu0 %v510, 80
        %v519 = vpop.permute.xlu0 %518
        %v520 = vsel %vm354, %v515, %v517
        %v521 = vsel %vm354, %v517, %v519
        %v525 = vadd.f32 %v501, %v520
        %v526 = vadd.f32 %v502, %v521
        %v527 = vadd.f32 %v503, %v519
        %528 = vset.pattern.permute.xlu0 29
        %529 = vperm.xlu0 %528, %v264
        %v530 = vpop.permute.xlu0 %529
        %v532 = vmul.f32 %v530, %v281
        %v533 = vmul.f32 %v530, %v277
        %v534 = vmul.f32 %v530, %v282
        %538 = vrot.lane.b32.xlu0 %v532, 64
        %v539 = vpop.permute.xlu0 %538
        %540 = vrot.lane.b32.xlu0 %v533, 64
        %v541 = vpop.permute.xlu0 %540
        %542 = vrot.lane.b32.xlu0 %v534, 64
        %v543 = vpop.permute.xlu0 %542
        %v544 = vsel %vm377, %v539, %v541
        %v545 = vsel %vm377, %v541, %v543
        %v549 = vadd.f32 %v525, %v544
        %v550 = vadd.f32 %v526, %v545
        %v551 = vadd.f32 %v527, %v543
        %552 = vset.pattern.permute.xlu0 36
        %553 = vperm.xlu0 %552, %v264
        %v554 = vpop.permute.xlu0 %553
        %v556 = vmul.f32 %v554, %v281
        %v557 = vmul.f32 %v554, %v277
        %v558 = vmul.f32 %v554, %v282
        %562 = vrot.lane.b32.xlu0 %v556, 48
        %v563 = vpop.permute.xlu0 %562
        %564 = vrot.lane.b32.xlu0 %v557, 48
        %v565 = vpop.permute.xlu0 %564
        %566 = vrot.lane.b32.xlu0 %v558, 48
        %v567 = vpop.permute.xlu0 %566
        %v568 = vsel %vm400, %v563, %v565
        %v569 = vsel %vm400, %v565, %v567
        %v573 = vadd.f32 %v549, %v568
        %v574 = vadd.f32 %v550, %v569
        %v575 = vadd.f32 %v551, %v567
        %576 = vset.pattern.permute.xlu0 43
        %577 = vperm.xlu0 %576, %v264
        %v578 = vpop.permute.xlu0 %577
        %v580 = vmul.f32 %v578, %v281
        %v581 = vmul.f32 %v578, %v277
        %v582 = vmul.f32 %v578, %v282
        %586 = vrot.lane.b32.xlu0 %v580, 32
        %v587 = vpop.permute.xlu0 %586
        %588 = vrot.lane.b32.xlu0 %v581, 32
        %v589 = vpop.permute.xlu0 %588
        %590 = vrot.lane.b32.xlu0 %v582, 32
        %v591 = vpop.permute.xlu0 %590
        %v592 = vsel %vm423, %v587, %v589
        %v593 = vsel %vm423, %v589, %v591
        %v597 = vadd.f32 %v573, %v592
        %v598 = vadd.f32 %v574, %v593
        %v599 = vadd.f32 %v575, %v591
        %vm600 = vcmp.ge.s32.totalorder %v266, 2
        %v601 = vsel %vm600, 1, 0
        %v602 = vlaneseq
        %v603 = vshrl.u32 %v602, 7
        %v604 = vsub.s32 0, %v603
        %v605 = vrot.slane %v601, %v604
        %v606 = vlaneseq
        %v607 = vshrl.u32 %v606, 7
        %v608 = vsub.s32 1, %v607
        %v609 = vrot.slane %v601, %v608
        %vm610 = vcmp.eq.s32.totalorder %v605, 1
        %vm611 = vcmp.eq.s32.totalorder %v609, 1
        %615 = vrot.lane.b32.xlu0 %v597, 127
        %v616 = vpop.permute.xlu0 %615
        %617 = vrot.lane.b32.xlu0 %v598, 127
        %v618 = vpop.permute.xlu0 %617
        %619 = vrot.lane.b32.xlu0 %v599, 127
        %v620 = vpop.permute.xlu0 %619
        %vm621 = vcmask 1039360
        %v622 = vsel %vm621, %v616, %v618
        %v623 = vsel %vm621, %v618, %v620
        %v626 = vsel %vm610, %v622, 0.0
        %v627 = vsel %vm611, %v623, 0.0
        %v628 = vadd.f32 %v444, %v626
        %v629 = vadd.f32 %v445, %v627
        %630 = vset.pattern.permute.xlu0 2
        %631 = vperm.xlu0 %630, %v264
        %v632 = vpop.permute.xlu0 %631
        %v634 = vmul.f32 %v632, %v281
        %v635 = vmul.f32 %v632, %v277
        %v636 = vmul.f32 %v632, %v282
        %v637 = vadd.f32 %v634, 0.0
        %v638 = vadd.f32 %v635, 0.0
        %v639 = vadd.f32 %v636, 0.0
        %640 = vset.pattern.permute.xlu0 9
        %641 = vperm.xlu0 %640, %v264
        %v642 = vpop.permute.xlu0 %641
        %v644 = vmul.f32 %v642, %v281
        %v645 = vmul.f32 %v642, %v277
        %v646 = vmul.f32 %v642, %v282
        %650 = vrot.lane.b32.xlu0 %v644, 112
        %v651 = vpop.permute.xlu0 %650
        %652 = vrot.lane.b32.xlu0 %v645, 112
        %v653 = vpop.permute.xlu0 %652
        %654 = vrot.lane.b32.xlu0 %v646, 112
        %v655 = vpop.permute.xlu0 %654
        %v656 = vsel %vm308, %v651, %v653
        %v657 = vsel %vm308, %v653, %v655
        %v661 = vadd.f32 %v637, %v656
        %v662 = vadd.f32 %v638, %v657
        %v663 = vadd.f32 %v639, %v655
        %664 = vset.pattern.permute.xlu0 16
        %665 = vperm.xlu0 %664, %v264
        %v666 = vpop.permute.xlu0 %665
        %v668 = vmul.f32 %v666, %v281
        %v669 = vmul.f32 %v666, %v277
        %v670 = vmul.f32 %v666, %v282
        %674 = vrot.lane.b32.xlu0 %v668, 96
        %v675 = vpop.permute.xlu0 %674
        %676 = vrot.lane.b32.xlu0 %v669, 96
        %v677 = vpop.permute.xlu0 %676
        %678 = vrot.lane.b32.xlu0 %v670, 96
        %v679 = vpop.permute.xlu0 %678
        %v680 = vsel %vm331, %v675, %v677
        %v681 = vsel %vm331, %v677, %v679
        %v685 = vadd.f32 %v661, %v680
        %v686 = vadd.f32 %v662, %v681
        %v687 = vadd.f32 %v663, %v679
        %688 = vset.pattern.permute.xlu0 23
        %689 = vperm.xlu0 %688, %v264
        %v690 = vpop.permute.xlu0 %689
        %v692 = vmul.f32 %v690, %v281
        %v693 = vmul.f32 %v690, %v277
        %v694 = vmul.f32 %v690, %v282
        %698 = vrot.lane.b32.xlu0 %v692, 80
        %v699 = vpop.permute.xlu0 %698
        %700 = vrot.lane.b32.xlu0 %v693, 80
        %v701 = vpop.permute.xlu0 %700
        %702 = vrot.lane.b32.xlu0 %v694, 80
        %v703 = vpop.permute.xlu0 %702
        %v704 = vsel %vm354, %v699, %v701
        %v705 = vsel %vm354, %v701, %v703
        %v709 = vadd.f32 %v685, %v704
        %v710 = vadd.f32 %v686, %v705
        %v711 = vadd.f32 %v687, %v703
        %712 = vset.pattern.permute.xlu0 30
        %713 = vperm.xlu0 %712, %v264
        %v714 = vpop.permute.xlu0 %713
        %v716 = vmul.f32 %v714, %v281
        %v717 = vmul.f32 %v714, %v277
        %v718 = vmul.f32 %v714, %v282
        %722 = vrot.lane.b32.xlu0 %v716, 64
        %v723 = vpop.permute.xlu0 %722
        %724 = vrot.lane.b32.xlu0 %v717, 64
        %v725 = vpop.permute.xlu0 %724
        %726 = vrot.lane.b32.xlu0 %v718, 64
        %v727 = vpop.permute.xlu0 %726
        %v728 = vsel %vm377, %v723, %v725
        %v729 = vsel %vm377, %v725, %v727
        %v733 = vadd.f32 %v709, %v728
        %v734 = vadd.f32 %v710, %v729
        %v735 = vadd.f32 %v711, %v727
        %736 = vset.pattern.permute.xlu0 37
        %737 = vperm.xlu0 %736, %v264
        %v738 = vpop.permute.xlu0 %737
        %v740 = vmul.f32 %v738, %v281
        %v741 = vmul.f32 %v738, %v277
        %v742 = vmul.f32 %v738, %v282
        %746 = vrot.lane.b32.xlu0 %v740, 48
        %v747 = vpop.permute.xlu0 %746
        %748 = vrot.lane.b32.xlu0 %v741, 48
        %v749 = vpop.permute.xlu0 %748
        %750 = vrot.lane.b32.xlu0 %v742, 48
        %v751 = vpop.permute.xlu0 %750
        %v752 = vsel %vm400, %v747, %v749
        %v753 = vsel %vm400, %v749, %v751
        %v757 = vadd.f32 %v733, %v752
        %v758 = vadd.f32 %v734, %v753
        %v759 = vadd.f32 %v735, %v751
        %760 = vset.pattern.permute.xlu0 44
        %761 = vperm.xlu0 %760, %v264
        %v762 = vpop.permute.xlu0 %761
        %v764 = vmul.f32 %v762, %v281
        %v765 = vmul.f32 %v762, %v277
        %v766 = vmul.f32 %v762, %v282
        %770 = vrot.lane.b32.xlu0 %v764, 32
        %v771 = vpop.permute.xlu0 %770
        %772 = vrot.lane.b32.xlu0 %v765, 32
        %v773 = vpop.permute.xlu0 %772
        %774 = vrot.lane.b32.xlu0 %v766, 32
        %v775 = vpop.permute.xlu0 %774
        %v776 = vsel %vm423, %v771, %v773
        %v777 = vsel %vm423, %v773, %v775
        %v781 = vadd.f32 %v757, %v776
        %v782 = vadd.f32 %v758, %v777
        %v783 = vadd.f32 %v759, %v775
        %vm784 = vcmp.ge.s32.totalorder %v266, 1
        %v785 = vsel %vm784, 1, 0
        %v786 = vlaneseq
        %v787 = vshrl.u32 %v786, 7
        %v788 = vsub.s32 0, %v787
        %v789 = vrot.slane %v785, %v788
        %v790 = vlaneseq
        %v791 = vshrl.u32 %v790, 7
        %v792 = vsub.s32 1, %v791
        %v793 = vrot.slane %v785, %v792
        %vm794 = vcmp.eq.s32.totalorder %v789, 1
        %vm795 = vcmp.eq.s32.totalorder %v793, 1
        %799 = vrot.lane.b32.xlu0 %v781, 126
        %v800 = vpop.permute.xlu0 %799
        %801 = vrot.lane.b32.xlu0 %v782, 126
        %v802 = vpop.permute.xlu0 %801
        %803 = vrot.lane.b32.xlu0 %v783, 126
        %v804 = vpop.permute.xlu0 %803
        %vm805 = vcmask 1031168
        %v806 = vsel %vm805, %v800, %v802
        %v807 = vsel %vm805, %v802, %v804
        %v810 = vsel %vm794, %v806, 0.0
        %v811 = vsel %vm795, %v807, 0.0
        %v812 = vadd.f32 %v628, %v810
        %v813 = vadd.f32 %v629, %v811
        %814 = vset.pattern.permute.xlu0 3
        %815 = vperm.xlu0 %814, %v264
        %v816 = vpop.permute.xlu0 %815
        %v818 = vmul.f32 %v816, %v281
        %v819 = vmul.f32 %v816, %v277
        %v820 = vmul.f32 %v816, %v282
        %v821 = vadd.f32 %v818, 0.0
        %v822 = vadd.f32 %v819, 0.0
        %v823 = vadd.f32 %v820, 0.0
        %824 = vset.pattern.permute.xlu0 10
        %825 = vperm.xlu0 %824, %v264
        %v826 = vpop.permute.xlu0 %825
        %v828 = vmul.f32 %v826, %v281
        %v829 = vmul.f32 %v826, %v277
        %v830 = vmul.f32 %v826, %v282
        %834 = vrot.lane.b32.xlu0 %v828, 112
        %v835 = vpop.permute.xlu0 %834
        %836 = vrot.lane.b32.xlu0 %v829, 112
        %v837 = vpop.permute.xlu0 %836
        %838 = vrot.lane.b32.xlu0 %v830, 112
        %v839 = vpop.permute.xlu0 %838
        %v840 = vsel %vm308, %v835, %v837
        %v841 = vsel %vm308, %v837, %v839
        %v845 = vadd.f32 %v821, %v840
        %v846 = vadd.f32 %v822, %v841
        %v847 = vadd.f32 %v823, %v839
        %848 = vset.pattern.permute.xlu0 17
        %849 = vperm.xlu0 %848, %v264
        %v850 = vpop.permute.xlu0 %849
        %v852 = vmul.f32 %v850, %v281
        %v853 = vmul.f32 %v850, %v277
        %v854 = vmul.f32 %v850, %v282
        %858 = vrot.lane.b32.xlu0 %v852, 96
        %v859 = vpop.permute.xlu0 %858
        %860 = vrot.lane.b32.xlu0 %v853, 96
        %v861 = vpop.permute.xlu0 %860
        %862 = vrot.lane.b32.xlu0 %v854, 96
        %v863 = vpop.permute.xlu0 %862
        %v864 = vsel %vm331, %v859, %v861
        %v865 = vsel %vm331, %v861, %v863
        %v869 = vadd.f32 %v845, %v864
        %v870 = vadd.f32 %v846, %v865
        %v871 = vadd.f32 %v847, %v863
        %872 = vset.pattern.permute.xlu0 24
        %873 = vperm.xlu0 %872, %v264
        %v874 = vpop.permute.xlu0 %873
        %v876 = vmul.f32 %v874, %v281
        %v877 = vmul.f32 %v874, %v277
        %v878 = vmul.f32 %v874, %v282
        %882 = vrot.lane.b32.xlu0 %v876, 80
        %v883 = vpop.permute.xlu0 %882
        %884 = vrot.lane.b32.xlu0 %v877, 80
        %v885 = vpop.permute.xlu0 %884
        %886 = vrot.lane.b32.xlu0 %v878, 80
        %v887 = vpop.permute.xlu0 %886
        %v888 = vsel %vm354, %v883, %v885
        %v889 = vsel %vm354, %v885, %v887
        %v893 = vadd.f32 %v869, %v888
        %v894 = vadd.f32 %v870, %v889
        %v895 = vadd.f32 %v871, %v887
        %896 = vset.pattern.permute.xlu0 31
        %897 = vperm.xlu0 %896, %v264
        %v898 = vpop.permute.xlu0 %897
        %v900 = vmul.f32 %v898, %v281
        %v901 = vmul.f32 %v898, %v277
        %v902 = vmul.f32 %v898, %v282
        %906 = vrot.lane.b32.xlu0 %v900, 64
        %v907 = vpop.permute.xlu0 %906
        %908 = vrot.lane.b32.xlu0 %v901, 64
        %v909 = vpop.permute.xlu0 %908
        %910 = vrot.lane.b32.xlu0 %v902, 64
        %v911 = vpop.permute.xlu0 %910
        %v912 = vsel %vm377, %v907, %v909
        %v913 = vsel %vm377, %v909, %v911
        %v917 = vadd.f32 %v893, %v912
        %v918 = vadd.f32 %v894, %v913
        %v919 = vadd.f32 %v895, %v911
        %920 = vset.pattern.permute.xlu0 38
        %921 = vperm.xlu0 %920, %v264
        %v922 = vpop.permute.xlu0 %921
        %v924 = vmul.f32 %v922, %v281
        %v925 = vmul.f32 %v922, %v277
        %v926 = vmul.f32 %v922, %v282
        %930 = vrot.lane.b32.xlu0 %v924, 48
        %v931 = vpop.permute.xlu0 %930
        %932 = vrot.lane.b32.xlu0 %v925, 48
        %v933 = vpop.permute.xlu0 %932
        %934 = vrot.lane.b32.xlu0 %v926, 48
        %v935 = vpop.permute.xlu0 %934
        %v936 = vsel %vm400, %v931, %v933
        %v937 = vsel %vm400, %v933, %v935
        %v941 = vadd.f32 %v917, %v936
        %v942 = vadd.f32 %v918, %v937
        %v943 = vadd.f32 %v919, %v935
        %944 = vset.pattern.permute.xlu0 45
        %945 = vperm.xlu0 %944, %v264
        %v946 = vpop.permute.xlu0 %945
        %v948 = vmul.f32 %v946, %v281
        %v949 = vmul.f32 %v946, %v277
        %v950 = vmul.f32 %v946, %v282
        %954 = vrot.lane.b32.xlu0 %v948, 32
        %v955 = vpop.permute.xlu0 %954
        %956 = vrot.lane.b32.xlu0 %v949, 32
        %v957 = vpop.permute.xlu0 %956
        %958 = vrot.lane.b32.xlu0 %v950, 32
        %v959 = vpop.permute.xlu0 %958
        %v960 = vsel %vm423, %v955, %v957
        %v961 = vsel %vm423, %v957, %v959
        %v965 = vadd.f32 %v941, %v960
        %v966 = vadd.f32 %v942, %v961
        %v967 = vadd.f32 %v943, %v959
        %971 = vrot.lane.b32.xlu0 %v965, 125
        %v972 = vpop.permute.xlu0 %971
        %973 = vrot.lane.b32.xlu0 %v966, 125
        %v974 = vpop.permute.xlu0 %973
        %975 = vrot.lane.b32.xlu0 %v967, 125
        %v976 = vpop.permute.xlu0 %975
        %vm977 = vcmask 1022976
        %v978 = vsel %vm977, %v972, %v974
        %v979 = vsel %vm977, %v974, %v976
        %v982 = vadd.f32 %v812, %v978
        %v983 = vadd.f32 %v813, %v979
        %984 = vset.pattern.permute.xlu0 4
        %985 = vperm.xlu0 %984, %v264
        %v986 = vpop.permute.xlu0 %985
        %v988 = vmul.f32 %v986, %v281
        %v989 = vmul.f32 %v986, %v277
        %v990 = vmul.f32 %v986, %v282
        %v991 = vadd.f32 %v988, 0.0
        %v992 = vadd.f32 %v989, 0.0
        %v993 = vadd.f32 %v990, 0.0
        %994 = vset.pattern.permute.xlu0 11
        %995 = vperm.xlu0 %994, %v264
        %v996 = vpop.permute.xlu0 %995
        %v998 = vmul.f32 %v996, %v281
        %v999 = vmul.f32 %v996, %v277
        %v1000 = vmul.f32 %v996, %v282
        %1004 = vrot.lane.b32.xlu0 %v998, 112
        %v1005 = vpop.permute.xlu0 %1004
        %1006 = vrot.lane.b32.xlu0 %v999, 112
        %v1007 = vpop.permute.xlu0 %1006
        %1008 = vrot.lane.b32.xlu0 %v1000, 112
        %v1009 = vpop.permute.xlu0 %1008
        %v1010 = vsel %vm308, %v1005, %v1007
        %v1011 = vsel %vm308, %v1007, %v1009
        %v1015 = vadd.f32 %v991, %v1010
        %v1016 = vadd.f32 %v992, %v1011
        %v1017 = vadd.f32 %v993, %v1009
        %1018 = vset.pattern.permute.xlu0 18
        %1019 = vperm.xlu0 %1018, %v264
        %v1020 = vpop.permute.xlu0 %1019
        %v1022 = vmul.f32 %v1020, %v281
        %v1023 = vmul.f32 %v1020, %v277
        %v1024 = vmul.f32 %v1020, %v282
        %1028 = vrot.lane.b32.xlu0 %v1022, 96
        %v1029 = vpop.permute.xlu0 %1028
        %1030 = vrot.lane.b32.xlu0 %v1023, 96
        %v1031 = vpop.permute.xlu0 %1030
        %1032 = vrot.lane.b32.xlu0 %v1024, 96
        %v1033 = vpop.permute.xlu0 %1032
        %v1034 = vsel %vm331, %v1029, %v1031
        %v1035 = vsel %vm331, %v1031, %v1033
        %v1039 = vadd.f32 %v1015, %v1034
        %v1040 = vadd.f32 %v1016, %v1035
        %v1041 = vadd.f32 %v1017, %v1033
        %1042 = vset.pattern.permute.xlu0 25
        %1043 = vperm.xlu0 %1042, %v264
        %v1044 = vpop.permute.xlu0 %1043
        %v1046 = vmul.f32 %v1044, %v281
        %v1047 = vmul.f32 %v1044, %v277
        %v1048 = vmul.f32 %v1044, %v282
        %1052 = vrot.lane.b32.xlu0 %v1046, 80
        %v1053 = vpop.permute.xlu0 %1052
        %1054 = vrot.lane.b32.xlu0 %v1047, 80
        %v1055 = vpop.permute.xlu0 %1054
        %1056 = vrot.lane.b32.xlu0 %v1048, 80
        %v1057 = vpop.permute.xlu0 %1056
        %v1058 = vsel %vm354, %v1053, %v1055
        %v1059 = vsel %vm354, %v1055, %v1057
        %v1063 = vadd.f32 %v1039, %v1058
        %v1064 = vadd.f32 %v1040, %v1059
        %v1065 = vadd.f32 %v1041, %v1057
        %1066 = vset.pattern.permute.xlu0 32
        %1067 = vperm.xlu0 %1066, %v264
        %v1068 = vpop.permute.xlu0 %1067
        %v1070 = vmul.f32 %v1068, %v281
        %v1071 = vmul.f32 %v1068, %v277
        %v1072 = vmul.f32 %v1068, %v282
        %1076 = vrot.lane.b32.xlu0 %v1070, 64
        %v1077 = vpop.permute.xlu0 %1076
        %1078 = vrot.lane.b32.xlu0 %v1071, 64
        %v1079 = vpop.permute.xlu0 %1078
        %1080 = vrot.lane.b32.xlu0 %v1072, 64
        %v1081 = vpop.permute.xlu0 %1080
        %v1082 = vsel %vm377, %v1077, %v1079
        %v1083 = vsel %vm377, %v1079, %v1081
        %v1087 = vadd.f32 %v1063, %v1082
        %v1088 = vadd.f32 %v1064, %v1083
        %v1089 = vadd.f32 %v1065, %v1081
        %1090 = vset.pattern.permute.xlu0 39
        %1091 = vperm.xlu0 %1090, %v264
        %v1092 = vpop.permute.xlu0 %1091
        %v1094 = vmul.f32 %v1092, %v281
        %v1095 = vmul.f32 %v1092, %v277
        %v1096 = vmul.f32 %v1092, %v282
        %1100 = vrot.lane.b32.xlu0 %v1094, 48
        %v1101 = vpop.permute.xlu0 %1100
        %1102 = vrot.lane.b32.xlu0 %v1095, 48
        %v1103 = vpop.permute.xlu0 %1102
        %1104 = vrot.lane.b32.xlu0 %v1096, 48
        %v1105 = vpop.permute.xlu0 %1104
        %v1106 = vsel %vm400, %v1101, %v1103
        %v1107 = vsel %vm400, %v1103, %v1105
        %v1111 = vadd.f32 %v1087, %v1106
        %v1112 = vadd.f32 %v1088, %v1107
        %v1113 = vadd.f32 %v1089, %v1105
        %1114 = vset.pattern.permute.xlu0 46
        %1115 = vperm.xlu0 %1114, %v264
        %v1116 = vpop.permute.xlu0 %1115
        %v1118 = vmul.f32 %v1116, %v281
        %v1119 = vmul.f32 %v1116, %v277
        %v1120 = vmul.f32 %v1116, %v282
        %1124 = vrot.lane.b32.xlu0 %v1118, 32
        %v1125 = vpop.permute.xlu0 %1124
        %1126 = vrot.lane.b32.xlu0 %v1119, 32
        %v1127 = vpop.permute.xlu0 %1126
        %1128 = vrot.lane.b32.xlu0 %v1120, 32
        %v1129 = vpop.permute.xlu0 %1128
        %v1130 = vsel %vm423, %v1125, %v1127
        %v1131 = vsel %vm423, %v1127, %v1129
        %v1135 = vadd.f32 %v1111, %v1130
        %v1136 = vadd.f32 %v1112, %v1131
        %v1137 = vadd.f32 %v1113, %v1129
        %vm1138 = vcmp.lt.s32.totalorder %v266, 15
        %v1139 = vsel %vm1138, 1, 0
        %v1140 = vlaneseq
        %v1141 = vshrl.u32 %v1140, 7
        %v1142 = vsub.s32 0, %v1141
        %v1143 = vrot.slane %v1139, %v1142
        %v1144 = vlaneseq
        %v1145 = vshrl.u32 %v1144, 7
        %v1146 = vsub.s32 1, %v1145
        %v1147 = vrot.slane %v1139, %v1146
        %vm1148 = vcmp.eq.s32.totalorder %v1143, 1
        %vm1149 = vcmp.eq.s32.totalorder %v1147, 1
        %1153 = vrot.lane.b32.xlu0 %v1135, 124
        %v1154 = vpop.permute.xlu0 %1153
        %1155 = vrot.lane.b32.xlu0 %v1136, 124
        %v1156 = vpop.permute.xlu0 %1155
        %1157 = vrot.lane.b32.xlu0 %v1137, 124
        %v1158 = vpop.permute.xlu0 %1157
        %vm1159 = vcmask 1014784
        %v1160 = vsel %vm1159, %v1154, %v1156
        %v1161 = vsel %vm1159, %v1156, %v1158
        %v1164 = vsel %vm1148, %v1160, 0.0
        %v1165 = vsel %vm1149, %v1161, 0.0
        %v1166 = vadd.f32 %v982, %v1164
        %v1167 = vadd.f32 %v983, %v1165
        %1168 = vset.pattern.permute.xlu0 5
        %1169 = vperm.xlu0 %1168, %v264
        %v1170 = vpop.permute.xlu0 %1169
        %v1172 = vmul.f32 %v1170, %v281
        %v1173 = vmul.f32 %v1170, %v277
        %v1174 = vmul.f32 %v1170, %v282
        %v1175 = vadd.f32 %v1172, 0.0
        %v1176 = vadd.f32 %v1173, 0.0
        %v1177 = vadd.f32 %v1174, 0.0
        %1178 = vset.pattern.permute.xlu0 12
        %1179 = vperm.xlu0 %1178, %v264
        %v1180 = vpop.permute.xlu0 %1179
        %v1182 = vmul.f32 %v1180, %v281
        %v1183 = vmul.f32 %v1180, %v277
        %v1184 = vmul.f32 %v1180, %v282
        %1188 = vrot.lane.b32.xlu0 %v1182, 112
        %v1189 = vpop.permute.xlu0 %1188
        %1190 = vrot.lane.b32.xlu0 %v1183, 112
        %v1191 = vpop.permute.xlu0 %1190
        %1192 = vrot.lane.b32.xlu0 %v1184, 112
        %v1193 = vpop.permute.xlu0 %1192
        %v1194 = vsel %vm308, %v1189, %v1191
        %v1195 = vsel %vm308, %v1191, %v1193
        %v1199 = vadd.f32 %v1175, %v1194
        %v1200 = vadd.f32 %v1176, %v1195
        %v1201 = vadd.f32 %v1177, %v1193
        %1202 = vset.pattern.permute.xlu0 19
        %1203 = vperm.xlu0 %1202, %v264
        %v1204 = vpop.permute.xlu0 %1203
        %v1206 = vmul.f32 %v1204, %v281
        %v1207 = vmul.f32 %v1204, %v277
        %v1208 = vmul.f32 %v1204, %v282
        %1212 = vrot.lane.b32.xlu0 %v1206, 96
        %v1213 = vpop.permute.xlu0 %1212
        %1214 = vrot.lane.b32.xlu0 %v1207, 96
        %v1215 = vpop.permute.xlu0 %1214
        %1216 = vrot.lane.b32.xlu0 %v1208, 96
        %v1217 = vpop.permute.xlu0 %1216
        %v1218 = vsel %vm331, %v1213, %v1215
        %v1219 = vsel %vm331, %v1215, %v1217
        %v1223 = vadd.f32 %v1199, %v1218
        %v1224 = vadd.f32 %v1200, %v1219
        %v1225 = vadd.f32 %v1201, %v1217
        %1226 = vset.pattern.permute.xlu0 26
        %1227 = vperm.xlu0 %1226, %v264
        %v1228 = vpop.permute.xlu0 %1227
        %v1230 = vmul.f32 %v1228, %v281
        %v1231 = vmul.f32 %v1228, %v277
        %v1232 = vmul.f32 %v1228, %v282
        %1236 = vrot.lane.b32.xlu0 %v1230, 80
        %v1237 = vpop.permute.xlu0 %1236
        %1238 = vrot.lane.b32.xlu0 %v1231, 80
        %v1239 = vpop.permute.xlu0 %1238
        %1240 = vrot.lane.b32.xlu0 %v1232, 80
        %v1241 = vpop.permute.xlu0 %1240
        %v1242 = vsel %vm354, %v1237, %v1239
        %v1243 = vsel %vm354, %v1239, %v1241
        %v1247 = vadd.f32 %v1223, %v1242
        %v1248 = vadd.f32 %v1224, %v1243
        %v1249 = vadd.f32 %v1225, %v1241
        %1250 = vset.pattern.permute.xlu0 33
        %1251 = vperm.xlu0 %1250, %v264
        %v1252 = vpop.permute.xlu0 %1251
        %v1254 = vmul.f32 %v1252, %v281
        %v1255 = vmul.f32 %v1252, %v277
        %v1256 = vmul.f32 %v1252, %v282
        %1260 = vrot.lane.b32.xlu0 %v1254, 64
        %v1261 = vpop.permute.xlu0 %1260
        %1262 = vrot.lane.b32.xlu0 %v1255, 64
        %v1263 = vpop.permute.xlu0 %1262
        %1264 = vrot.lane.b32.xlu0 %v1256, 64
        %v1265 = vpop.permute.xlu0 %1264
        %v1266 = vsel %vm377, %v1261, %v1263
        %v1267 = vsel %vm377, %v1263, %v1265
        %v1271 = vadd.f32 %v1247, %v1266
        %v1272 = vadd.f32 %v1248, %v1267
        %v1273 = vadd.f32 %v1249, %v1265
        %1274 = vset.pattern.permute.xlu0 40
        %1275 = vperm.xlu0 %1274, %v264
        %v1276 = vpop.permute.xlu0 %1275
        %v1278 = vmul.f32 %v1276, %v281
        %v1279 = vmul.f32 %v1276, %v277
        %v1280 = vmul.f32 %v1276, %v282
        %1284 = vrot.lane.b32.xlu0 %v1278, 48
        %v1285 = vpop.permute.xlu0 %1284
        %1286 = vrot.lane.b32.xlu0 %v1279, 48
        %v1287 = vpop.permute.xlu0 %1286
        %1288 = vrot.lane.b32.xlu0 %v1280, 48
        %v1289 = vpop.permute.xlu0 %1288
        %v1290 = vsel %vm400, %v1285, %v1287
        %v1291 = vsel %vm400, %v1287, %v1289
        %v1295 = vadd.f32 %v1271, %v1290
        %v1296 = vadd.f32 %v1272, %v1291
        %v1297 = vadd.f32 %v1273, %v1289
        %1298 = vset.pattern.permute.xlu0 47
        %1299 = vperm.xlu0 %1298, %v264
        %v1300 = vpop.permute.xlu0 %1299
        %v1302 = vmul.f32 %v1300, %v281
        %v1303 = vmul.f32 %v1300, %v277
        %v1304 = vmul.f32 %v1300, %v282
        %1308 = vrot.lane.b32.xlu0 %v1302, 32
        %v1309 = vpop.permute.xlu0 %1308
        %1310 = vrot.lane.b32.xlu0 %v1303, 32
        %v1311 = vpop.permute.xlu0 %1310
        %1312 = vrot.lane.b32.xlu0 %v1304, 32
        %v1313 = vpop.permute.xlu0 %1312
        %v1314 = vsel %vm423, %v1309, %v1311
        %v1315 = vsel %vm423, %v1311, %v1313
        %v1319 = vadd.f32 %v1295, %v1314
        %v1320 = vadd.f32 %v1296, %v1315
        %v1321 = vadd.f32 %v1297, %v1313
        %vm1322 = vcmp.lt.s32.totalorder %v266, 14
        %v1323 = vsel %vm1322, 1, 0
        %v1324 = vlaneseq
        %v1325 = vshrl.u32 %v1324, 7
        %v1326 = vsub.s32 0, %v1325
        %v1327 = vrot.slane %v1323, %v1326
        %v1328 = vlaneseq
        %v1329 = vshrl.u32 %v1328, 7
        %v1330 = vsub.s32 1, %v1329
        %v1331 = vrot.slane %v1323, %v1330
        %vm1332 = vcmp.eq.s32.totalorder %v1327, 1
        %vm1333 = vcmp.eq.s32.totalorder %v1331, 1
        %1337 = vrot.lane.b32.xlu0 %v1319, 123
        %v1338 = vpop.permute.xlu0 %1337
        %1339 = vrot.lane.b32.xlu0 %v1320, 123
        %v1340 = vpop.permute.xlu0 %1339
        %1341 = vrot.lane.b32.xlu0 %v1321, 123
        %v1342 = vpop.permute.xlu0 %1341
        %vm1343 = vcmask 1006592
        %v1344 = vsel %vm1343, %v1338, %v1340
        %v1345 = vsel %vm1343, %v1340, %v1342
        %v1348 = vsel %vm1332, %v1344, 0.0
        %v1349 = vsel %vm1333, %v1345, 0.0
        %v1350 = vadd.f32 %v1166, %v1348
        %v1351 = vadd.f32 %v1167, %v1349
        %1352 = vset.pattern.permute.xlu0 6
        %1353 = vperm.xlu0 %1352, %v264
        %v1354 = vpop.permute.xlu0 %1353
        %v1356 = vmul.f32 %v1354, %v281
        %v1357 = vmul.f32 %v1354, %v277
        %v1358 = vmul.f32 %v1354, %v282
        %v1359 = vadd.f32 %v1356, 0.0
        %v1360 = vadd.f32 %v1357, 0.0
        %v1361 = vadd.f32 %v1358, 0.0
        %1362 = vset.pattern.permute.xlu0 13
        %1363 = vperm.xlu0 %1362, %v264
        %v1364 = vpop.permute.xlu0 %1363
        %v1366 = vmul.f32 %v1364, %v281
        %v1367 = vmul.f32 %v1364, %v277
        %v1368 = vmul.f32 %v1364, %v282
        %1372 = vrot.lane.b32.xlu0 %v1366, 112
        %v1373 = vpop.permute.xlu0 %1372
        %1374 = vrot.lane.b32.xlu0 %v1367, 112
        %v1375 = vpop.permute.xlu0 %1374
        %1376 = vrot.lane.b32.xlu0 %v1368, 112
        %v1377 = vpop.permute.xlu0 %1376
        %v1378 = vsel %vm308, %v1373, %v1375
        %v1379 = vsel %vm308, %v1375, %v1377
        %v1383 = vadd.f32 %v1359, %v1378
        %v1384 = vadd.f32 %v1360, %v1379
        %v1385 = vadd.f32 %v1361, %v1377
        %1386 = vset.pattern.permute.xlu0 20
        %1387 = vperm.xlu0 %1386, %v264
        %v1388 = vpop.permute.xlu0 %1387
        %v1390 = vmul.f32 %v1388, %v281
        %v1391 = vmul.f32 %v1388, %v277
        %v1392 = vmul.f32 %v1388, %v282
        %1396 = vrot.lane.b32.xlu0 %v1390, 96
        %v1397 = vpop.permute.xlu0 %1396
        %1398 = vrot.lane.b32.xlu0 %v1391, 96
        %v1399 = vpop.permute.xlu0 %1398
        %1400 = vrot.lane.b32.xlu0 %v1392, 96
        %v1401 = vpop.permute.xlu0 %1400
        %v1402 = vsel %vm331, %v1397, %v1399
        %v1403 = vsel %vm331, %v1399, %v1401
        %v1407 = vadd.f32 %v1383, %v1402
        %v1408 = vadd.f32 %v1384, %v1403
        %v1409 = vadd.f32 %v1385, %v1401
        %1410 = vset.pattern.permute.xlu0 27
        %1411 = vperm.xlu0 %1410, %v264
        %v1412 = vpop.permute.xlu0 %1411
        %v1414 = vmul.f32 %v1412, %v281
        %v1415 = vmul.f32 %v1412, %v277
        %v1416 = vmul.f32 %v1412, %v282
        %1420 = vrot.lane.b32.xlu0 %v1414, 80
        %v1421 = vpop.permute.xlu0 %1420
        %1422 = vrot.lane.b32.xlu0 %v1415, 80
        %v1423 = vpop.permute.xlu0 %1422
        %1424 = vrot.lane.b32.xlu0 %v1416, 80
        %v1425 = vpop.permute.xlu0 %1424
        %v1426 = vsel %vm354, %v1421, %v1423
        %v1427 = vsel %vm354, %v1423, %v1425
        %v1431 = vadd.f32 %v1407, %v1426
        %v1432 = vadd.f32 %v1408, %v1427
        %v1433 = vadd.f32 %v1409, %v1425
        %1434 = vset.pattern.permute.xlu0 34
        %1435 = vperm.xlu0 %1434, %v264
        %v1436 = vpop.permute.xlu0 %1435
        %v1438 = vmul.f32 %v1436, %v281
        %v1439 = vmul.f32 %v1436, %v277
        %v1440 = vmul.f32 %v1436, %v282
        %1444 = vrot.lane.b32.xlu0 %v1438, 64
        %v1445 = vpop.permute.xlu0 %1444
        %1446 = vrot.lane.b32.xlu0 %v1439, 64
        %v1447 = vpop.permute.xlu0 %1446
        %1448 = vrot.lane.b32.xlu0 %v1440, 64
        %v1449 = vpop.permute.xlu0 %1448
        %v1450 = vsel %vm377, %v1445, %v1447
        %v1451 = vsel %vm377, %v1447, %v1449
        %v1455 = vadd.f32 %v1431, %v1450
        %v1456 = vadd.f32 %v1432, %v1451
        %v1457 = vadd.f32 %v1433, %v1449
        %1458 = vset.pattern.permute.xlu0 41
        %1459 = vperm.xlu0 %1458, %v264
        %v1460 = vpop.permute.xlu0 %1459
        %v1462 = vmul.f32 %v1460, %v281
        %v1463 = vmul.f32 %v1460, %v277
        %v1464 = vmul.f32 %v1460, %v282
        %1468 = vrot.lane.b32.xlu0 %v1462, 48
        %v1469 = vpop.permute.xlu0 %1468
        %1470 = vrot.lane.b32.xlu0 %v1463, 48
        %v1471 = vpop.permute.xlu0 %1470
        %1472 = vrot.lane.b32.xlu0 %v1464, 48
        %v1473 = vpop.permute.xlu0 %1472
        %v1474 = vsel %vm400, %v1469, %v1471
        %v1475 = vsel %vm400, %v1471, %v1473
        %v1479 = vadd.f32 %v1455, %v1474
        %v1480 = vadd.f32 %v1456, %v1475
        %v1481 = vadd.f32 %v1457, %v1473
        %1482 = vset.pattern.permute.xlu0 48
        %1483 = vperm.xlu0 %1482, %v264
        %v1484 = vpop.permute.xlu0 %1483
        %v1486 = vmul.f32 %v1484, %v281
        %v1487 = vmul.f32 %v1484, %v277
        %v1488 = vmul.f32 %v1484, %v282
        %1492 = vrot.lane.b32.xlu0 %v1486, 32
        %v1493 = vpop.permute.xlu0 %1492
        %1494 = vrot.lane.b32.xlu0 %v1487, 32
        %v1495 = vpop.permute.xlu0 %1494
        %1496 = vrot.lane.b32.xlu0 %v1488, 32
        %v1497 = vpop.permute.xlu0 %1496
        %v1498 = vsel %vm423, %v1493, %v1495
        %v1499 = vsel %vm423, %v1495, %v1497
        %v1503 = vadd.f32 %v1479, %v1498
        %v1504 = vadd.f32 %v1480, %v1499
        %v1505 = vadd.f32 %v1481, %v1497
        %vm1506 = vcmp.lt.s32.totalorder %v266, 13
        %v1507 = vsel %vm1506, 1, 0
        %v1508 = vlaneseq
        %v1509 = vshrl.u32 %v1508, 7
        %v1510 = vsub.s32 0, %v1509
        %v1511 = vrot.slane %v1507, %v1510
        %v1512 = vlaneseq
        %v1513 = vshrl.u32 %v1512, 7
        %v1514 = vsub.s32 1, %v1513
        %v1515 = vrot.slane %v1507, %v1514
        %vm1516 = vcmp.eq.s32.totalorder %v1511, 1
        %vm1517 = vcmp.eq.s32.totalorder %v1515, 1
        %1521 = vrot.lane.b32.xlu0 %v1503, 122
        %v1522 = vpop.permute.xlu0 %1521
        %1523 = vrot.lane.b32.xlu0 %v1504, 122
        %v1524 = vpop.permute.xlu0 %1523
        %1525 = vrot.lane.b32.xlu0 %v1505, 122
        %v1526 = vpop.permute.xlu0 %1525
        %vm1527 = vcmask 998400
        %v1528 = vsel %vm1527, %v1522, %v1524
        %v1529 = vsel %vm1527, %v1524, %v1526
        %v1532 = vsel %vm1516, %v1528, 0.0
        %v1533 = vsel %vm1517, %v1529, 0.0
        %v1534 = vadd.f32 %v1350, %v1532
        %v1535 = vadd.f32 %v1351, %v1533
        %vm1536 = vcmask 1041408
        %v1537 = vsel %vm1536, %v1534, 0.0
        %v1538 = vrot.slane %v1537, 4
        %v1539 = vadd.f32 %v1537, %v1538
        %v1540 = vrot.slane %v1539, 2
        %v1541 = vadd.f32 %v1539, %v1540
        %v1542 = vrot.slane %v1541, 1
        %v1543 = vadd.f32 %v1541, %v1542
        %v1544 = vsel %vm1536, %v1535, 0.0
        %v1545 = vrot.slane %v1544, 4
        %v1546 = vadd.f32 %v1544, %v1545
        %v1547 = vrot.slane %v1546, 2
        %v1548 = vadd.f32 %v1546, %v1547
        %v1549 = vrot.slane %v1548, 1
        %v1550 = vadd.f32 %v1548, %v1549
        %v1551 = vstv %s265
        %v1552 = vadd.f32 %v1543, %v1551
        %v1553 = vadd.f32 %v1550, %v1551
        %v1554 = vsub.f32 0.0, %v1552
        %v1555 = vsub.f32 0.0, %v1553
        %v1556 = vmul.f32 %v1554, 1.442695
        %v1557 = vpow.pop %v1556
        %v1558 = vmul.f32 %v1555, 1.442695
        %v1559 = vpow.pop %v1558
        %v1560 = vadd.f32 %v1557, 1.0
        %v1561 = vadd.f32 %v1559, 1.0
        %v1562 = vrcp.pop %v1560
        %v1563 = vrcp.pop %v1561
        %v1566 = vcombine.low %v1562, %v1563
        %v1568 = vmul.f32 %v228, %v1566
        %1569 = vst [vmem:[%s227] sm:$0xff] %v1568
        %s1570 = sand.u32 %s120, 1
        %s1571 = scalar_lea.sflag [#allocation5], %s1570
        %s1572 = sand.u32 %s120, 1
        %s1573 = smul.addr %s1572, 8
        %s1574 = scalar_lea.vmem [#allocation8], %s1573
        // Predicated region
        $region45: #{tpu_custom_call.1} parent=35 // pred_check
          %p1575 = pneg %p130
        $region46: #{tpu_custom_call.1} parent=35 // pred_check_branch
          %1577 = sbr.rel (%p1575) target = $region48
        $region47: #{tpu_custom_call.1} parent=35 // pred_region
          %s1579 = ssub.s32 128, 128
          %1580 = vsyncadd %s1571, %s1579
          %s1581 = smul.addr %s23, 2
          %s1582 = smul.addr %s1581, 64
          %s1583 = scalar_lea.hbm %s4, %s1582
          %s1585 = sshll.u32 %s1574, 4
          %s1586 = int_to_ptr.vmem [resolvable:$true] %s1585
          %1588 = dma.vmem_to_hbm [thread:$0]  %s1586, 128, %s1583, %s1571
        $region48: #{tpu_custom_call.1} parent=35 // pred_fallthru
          _
      $region36: #{tpu_custom_call.1} parent=5 // pred_fallthru
        _
      %p1589 = scmp.le.s32.totalorder 2, %s18
      // Predicated region
      $region49: #{tpu_custom_call.1} parent=5 // pred_check
        %p1590 = pneg %p1589
      $region50: #{tpu_custom_call.1} parent=5 // pred_check_branch
        %1592 = sbr.rel (%p1590) target = $region52
      $region51: #{tpu_custom_call.1} parent=5 // pred_region
        %s1593 = ssub.s32 %s18, 2
        // Predicated region
        $region53: #{tpu_custom_call.1} parent=51 // pred_check
          %p1594 = pneg %p136
        $region54: #{tpu_custom_call.1} parent=51 // pred_check_branch
          %1596 = sbr.rel (%p1594) target = $region56
        $region55: #{tpu_custom_call.1} parent=51 // pred_region
          %s1597 = sand.u32 %s121, 1
          %s1598 = scalar_lea.sflag [#allocation5], %s1597
          %s1599 = sand.u32 %s121, 1
          %s1600 = smul.addr %s1599, 8
          %s1601 = scalar_lea.vmem [#allocation8], %s1600
          %1602 = dma.done %s1598, 128
        $region56: #{tpu_custom_call.1} parent=51 // pred_fallthru
          _
      $region52: #{tpu_custom_call.1} parent=5 // pred_fallthru
        _
    $region6: #{tpu_custom_call.1} parent=1 // loop_footer
      %s22 = sadd.s32 1, %s18
    $region7: #{tpu_custom_call.1} parent=1 // loop_footer_branch
      %17 = sbr.rel target = $region3
    $region8: #{tpu_custom_call.1} parent=1 // loop_exit
      _
    %1603 = vsyncpa [#allocation4], 1
    %s1604 = scalar_lea.sflag [#allocation4], 1
    %1605 = vsyncpa %s1604, 1
    %1606 = vsyncpa [#allocation7], 1
    %s1607 = scalar_lea.sflag [#allocation7], 1
    %1608 = vsyncpa %s1607, 1
    %1609 = vsyncpa [#allocation5], 1
    %s1610 = scalar_lea.sflag [#allocation5], 1
    %1611 = vsyncpa %s1610, 1

</llo_original>
